<compile_context>
chip_gen: v6e
topology: v6e:2x2x1
jax: 0.10.0
libtpu: 0.0.40
codegen_flags: <defaults>
</compile_context>

<pallas_src>
import math
from functools import partial

import jax
import jax.numpy as jnp
from jax.experimental import pallas as pl
from jax.experimental.pallas import tpu as pltpu


# ----------------------------------------------------------------------------
# Fused kernel: bn1 -> relu -> conv1(1x1, bn2-scale folded) -> +b2 -> relu -> conv2(3x3, pad=1)
# Grid: (batch, ceil(H / TH)).  Each step produces TH output rows of one image.
# ----------------------------------------------------------------------------
def fused_dense_layer_kernel(x_ref, w1_ref, s1_ref, b1_ref, b2_ref, w2_ref,
                             o_ref, bp_ref, *, TH, W, H, Cin, Cmid, Cout):
    # x_ref : (Hp, W, Cin)       zero-padded NHWC image (Hp = GH*TH + 2), one batch element
    # w1_ref: (Cin, Cmid)        1x1-conv weight with bn2 scale folded in
    # s1/b1 : (1, Cin)           folded bn1 scale / bias
    # b2    : (1, Cmid)          folded bn2 bias (scale already folded into w1)
    # w2_ref: (9*Cmid, Cout)     3x3-conv weight, (dy, dx) major / channel minor
    # o_ref : (Cout, TH*W)       lane-dense output block
    # bp_ref: (TH+2, W+2, Cmid)  column-padded bottleneck slab (VMEM scratch)
    i = pl.program_id(1)
    row0 = pl.multiple_of(i * TH, TH)          # tile start in padded-x row coordinates

    # ---- Stage 1: bn1 + relu -> conv1 (1x1) -> + b2 -> relu -------------------------------
    # One matmul covers the TH interior rows AND both conv halo rows ((TH+2) rows total).
    xr = x_ref[pl.ds(row0, TH + 2), :, :].astype(jnp.float32)            # (TH+2, W, Cin)
    xm = xr.reshape((TH + 2) * W, Cin)
    h = jnp.maximum(xm * s1_ref[...] + b1_ref[...], 0.0)                 # bn1 + relu1
    y = jnp.dot(h.astype(w1_ref.dtype), w1_ref[...],
                preferred_element_type=jnp.float32)                      # conv1 (* bn2 scale)
    y = jnp.maximum(y + b2_ref[...], 0.0)                                # bn2 bias + relu2
    y = y.reshape(TH + 2, W, Cmid)

    # Rows outside the real image (top halo of tile 0, any row >= H) must act as the 3x3
    # conv's zero padding -> mask them to zero (padded x rows do NOT give zero after BN).
    gr = (row0 - 1) + jax.lax.broadcasted_iota(jnp.int32, (TH + 2, 1, 1), 0)
    y = jnp.where((gr >= 0) & (gr < H), y, 0.0)

    # Write interior columns; only the two 1-wide padding columns need explicit zeros.
    bp_ref[:, pl.ds(1, W), :] = y.astype(bp_ref.dtype)
    zcol = jnp.zeros((TH + 2, 1, Cmid), bp_ref.dtype)
    bp_ref[:, pl.ds(0, 1), :] = zcol
    bp_ref[:, pl.ds(W + 1, 1), :] = zcol

    # ---- Stage 2: 3x3 conv as 9 accumulating matmuls over shifted slab ref views ----------
    acc = jnp.zeros((TH * W, Cout), jnp.float32)
    for t in range(9):
        dy, dx = divmod(t, 3)
        tap = bp_ref[pl.ds(dy, TH), pl.ds(dx, W), :].reshape(TH * W, Cmid)
        acc = acc + jnp.dot(tap, w2_ref[pl.ds(t * Cmid, Cmid), :],
                            preferred_element_type=jnp.float32)

    # Lane-dense store: TH*W is a multiple of 128 (or the full H*W); transpose is one XLU op.
    o_ref[...] = acc.T.astype(o_ref.dtype)


def _choose_row_tile(H, W, Cmid, itemsize=4, max_slab_bytes=4 << 20):
    """Row-tile height TH.

    Smallest TH with (TH*W) % 128 == 0 (lane-dense output blocks) — NO divisibility-of-H
    requirement — then grown while the bottleneck slab stays small and >= 2 grid steps
    remain along H for pipelining / megacore sharding.  Falls back to TH = H for tiny images.
    """
    th = 128 // math.gcd(W, 128)
    if th >= H:
        return H
    while th * 2 < H and (2 * th + 2) * (W + 2) * Cmid * itemsize <= max_slab_bytes:
        th *= 2
    return th


# ----------------------------------------------------------------------------
# Wrapper: layout conversion, BN folding, weight reshapes, padding, pallas_call
# ----------------------------------------------------------------------------
def dense_layer_forward(x_nchw, params, eps=1e-5, mm_dtype=jnp.float32):
    # mm_dtype=jnp.bfloat16 halves HBM/VMEM traffic and doubles MXU rate on v6e/v7x
    # (accumulation stays f32); kept f32 here to satisfy the 1e-4 validation below.
    x = jnp.transpose(x_nchw, (0, 2, 3, 1))             # NCHW -> NHWC (channel-last matmuls)
    N, H, W, Cin = x.shape

    w1_t = params["conv1_w"]                            # (Cmid, Cin, 1, 1)  torch OIHW
    w2_t = params["conv2_w"]                            # (Cout, Cmid, 3, 3) torch OIHW
    Cmid, Cout = w1_t.shape[0], w2_t.shape[0]

    def fold_bn(gamma, beta, mean, var):
        scale = gamma / jnp.sqrt(var + eps)
        return scale, beta - mean * scale

    s1, b1 = fold_bn(*params["bn1"])                    # (Cin,)
    s2, b2 = fold_bn(*params["bn2"])                    # (Cmid,)

    # Fold bn2's per-channel scale into the 1x1 conv weight (once, at trace time).
    w1_m = (jnp.transpose(w1_t[:, :, 0, 0], (1, 0)) * s2[None, :]).astype(mm_dtype)   # (Cin, Cmid)
    w2_col = jnp.transpose(w2_t, (2, 3, 1, 0)).reshape(9 * Cmid, Cout).astype(mm_dtype)

    TH = _choose_row_tile(H, W, Cmid, itemsize=jnp.dtype(mm_dtype).itemsize)
    GH = pl.cdiv(H, TH)
    Hp = GH * TH + 2                                    # 1 halo row on top, rest at bottom
    x_pad = jnp.pad(x, ((0, 0), (1, Hp - 1 - H), (0, 0), (0, 0)))

    kernel = partial(fused_dense_layer_kernel, TH=TH, W=W, H=H,
                     Cin=Cin, Cmid=Cmid, Cout=Cout)

    # Advisory cost: low-flop, bandwidth-heavy (Cout = growth_rate underfills MXU columns).
    flops = 2 * N * H * W * Cmid * (Cin + 9 * Cout)
    bytes_accessed = (x.size * x.dtype.itemsize
                      + N * Cout * H * W * x.dtype.itemsize
                      + (w1_m.size + w2_col.size) * jnp.dtype(mm_dtype).itemsize)

    out_flat = pl.pallas_call(
        kernel,
        out_shape=jax.ShapeDtypeStruct((N, Cout, GH * TH * W), x.dtype),
        grid=(N, GH),
        in_specs=[
            pl.BlockSpec((None, Hp, W, Cin), lambda n, i: (n, 0, 0, 0)),   # padded image
            pl.BlockSpec((Cin, Cmid), lambda n, i: (0, 0)),                # w1 (* s2)
            pl.BlockSpec((1, Cin), lambda n, i: (0, 0)),                   # s1
            pl.BlockSpec((1, Cin), lambda n, i: (0, 0)),                   # b1
            pl.BlockSpec((1, Cmid), lambda n, i: (0, 0)),                  # b2
            pl.BlockSpec((9 * Cmid, Cout), lambda n, i: (0, 0)),           # w2 (im2col order)
        ],
        out_specs=pl.BlockSpec((None, Cout, TH * W), lambda n, i: (n, 0, i)),
        scratch_shapes=[pltpu.VMEM((TH + 2, W + 2, Cmid), mm_dtype)],
        compiler_params=pltpu.CompilerParams(
            dimension_semantics=("parallel", "parallel"),
            vmem_limit_bytes=64 * 1024 * 1024),
        cost_estimate=pl.CostEstimate(flops=int(flops), transcendentals=0,
                                      bytes_accessed=int(bytes_accessed)),
    )(x_pad, w1_m,
      s1.reshape(1, Cin), b1.reshape(1, Cin), b2.reshape(1, Cmid),
      w2_col)

    # Output is already channel-first; free reshape + row slice (no-op when H % TH == 0).
    return out_flat.reshape(N, Cout, GH * TH, W)[:, :, :H, :]


# ----------------------------------------------------------------------------
# Pure-JAX reference (mirrors the PyTorch module in eval mode) for validation
# ----------------------------------------------------------------------------
def reference_forward(x_nchw, params, eps=1e-5):
    def bn(x, gamma, beta, mean, var):
        g = gamma[None, :, None, None]
        b = beta[None, :, None, None]
        m = mean[None, :, None, None]
        v = var[None, :, None, None]
        return (x - m) / jnp.sqrt(v + eps) * g + b

    h = jax.nn.relu(bn(x_nchw, *params["bn1"]))
    h = jax.lax.conv_general_dilated(h, params["conv1_w"], (1, 1), "VALID",
                                     dimension_numbers=("NCHW", "OIHW", "NCHW"))
    h = jax.nn.relu(bn(h, *params["bn2"]))
    h = jax.lax.conv_general_dilated(h, params["conv2_w"], (1, 1), ((1, 1), (1, 1)),
                                     dimension_numbers=("NCHW", "OIHW", "NCHW"))
    return h


if __name__ == "__main__":
    # Module hyper-parameters (small but consistent with _DenseLayer.__init__)
    num_input_features = 4
    growth_rate = 8
    bn_size = 4
    drop_rate = 0.0                 # eval mode / no dropout
    Cmid = bn_size * growth_rate    # 32
    Cout = growth_rate              # 8

    N, H, W = 2, 16, 16

    key = jax.random.PRNGKey(0)
    kx, kw1, kw2, kg1, kb1, km1, kv1, kg2, kb2, km2, kv2 = jax.random.split(key, 11)

    x = jax.random.normal(kx, (N, num_input_features, H, W), jnp.float32)

    params = {
        "conv1_w": 0.1 * jax.random.normal(kw1, (Cmid, num_input_features, 1, 1), jnp.float32),
        "conv2_w": 0.1 * jax.random.normal(kw2, (Cout, Cmid, 3, 3), jnp.float32),
        # BN params: (gamma, beta, running_mean, running_var)
        "bn1": (
            jax.random.uniform(kg1, (num_input_features,), jnp.float32, 0.5, 1.5),
            0.1 * jax.random.normal(kb1, (num_input_features,), jnp.float32),
            0.1 * jax.random.normal(km1, (num_input_features,), jnp.float32),
            jax.random.uniform(kv1, (num_input_features,), jnp.float32, 0.5, 1.5),
        ),
        "bn2": (
            jax.random.uniform(kg2, (Cmid,), jnp.float32, 0.5, 1.5),
            0.1 * jax.random.normal(kb2, (Cmid,), jnp.float32),
            0.1 * jax.random.normal(km2, (Cmid,), jnp.float32),
            jax.random.uniform(kv2, (Cmid,), jnp.float32, 0.5, 1.5),
        ),
    }

    out = jax.block_until_ready(dense_layer_forward(x, params))
    ref = jax.block_until_ready(reference_forward(x, params))

    assert out.shape == (N, Cout, H, W), out.shape
    assert jnp.allclose(out, ref, atol=1e-4, rtol=1e-4), float(jnp.abs(out - ref).max())

    print("KERNEL_OK")
</pallas_src>

<mosaic_0001>
module attributes {stable_mosaic.version = 11 : i64} {
  func.func @fused_dense_layer_kernel(%arg0: i32, %arg1: i32, %arg2: memref<1x18x16x4xf32, #tpu.memory_space<vmem>>, %arg3: memref<4x32xf32, #tpu.memory_space<vmem>>, %arg4: memref<1x4xf32, #tpu.memory_space<vmem>>, %arg5: memref<1x4xf32, #tpu.memory_space<vmem>>, %arg6: memref<1x32xf32, #tpu.memory_space<vmem>>, %arg7: memref<288x8xf32, #tpu.memory_space<vmem>>, %arg8: memref<1x8x128xf32, #tpu.memory_space<vmem>>, %arg9: memref<10x18x32xf32, #tpu.memory_space<vmem>>) attributes {dimension_semantics = [#tpu.dimension_semantics<parallel>, #tpu.dimension_semantics<parallel>], iteration_bounds = array<i64: 2, 2>, scalar_prefetch = 0 : i64, scratch_operands = 1 : i64, tpu.core_type = #tpu.core_type<tc>, window_params = [{transform_indices = @transform_0, window_bounds = array<i64: 1, 18, 16, 4>}, {pipeline_mode = #tpu.pipeline_mode<synchronous>, transform_indices = @transform_1, window_bounds = array<i64: 4, 32>}, {pipeline_mode = #tpu.pipeline_mode<synchronous>, transform_indices = @transform_2, window_bounds = array<i64: 1, 4>}, {pipeline_mode = #tpu.pipeline_mode<synchronous>, transform_indices = @transform_3, window_bounds = array<i64: 1, 4>}, {pipeline_mode = #tpu.pipeline_mode<synchronous>, transform_indices = @transform_4, window_bounds = array<i64: 1, 32>}, {pipeline_mode = #tpu.pipeline_mode<synchronous>, transform_indices = @transform_5, window_bounds = array<i64: 288, 8>}, {transform_indices = @transform_6, window_bounds = array<i64: 1, 8, 128>}]} {
    %c8_i32 = arith.constant 8 : i32
    %0 = arith.muli %arg1, %c8_i32 : i32
    %1 = tpu.assume_multiple %0, 8 : i32
    %c0 = arith.constant 0 : index
    %2 = arith.index_cast %1 : i32 to index
    %c0_0 = arith.constant 0 : index
    %c0_1 = arith.constant 0 : index
    %3 = vector.load %arg2[%c0, %2, %c0_0, %c0_1] : memref<1x18x16x4xf32, #tpu.memory_space<vmem>>, vector<1x10x16x4xf32>
    %4 = vector.shape_cast %3 : vector<1x10x16x4xf32> to vector<10x16x4xf32>
    %5 = vector.shape_cast %4 : vector<10x16x4xf32> to vector<160x4xf32>
    %c0_2 = arith.constant 0 : index
    %c0_3 = arith.constant 0 : index
    %6 = vector.load %arg4[%c0_2, %c0_3] : memref<1x4xf32, #tpu.memory_space<vmem>>, vector<1x4xf32>
    %7 = vector.broadcast %6 : vector<1x4xf32> to vector<160x4xf32>
    %8 = arith.mulf %5, %7 : vector<160x4xf32>
    %c0_4 = arith.constant 0 : index
    %c0_5 = arith.constant 0 : index
    %9 = vector.load %arg5[%c0_4, %c0_5] : memref<1x4xf32, #tpu.memory_space<vmem>>, vector<1x4xf32>
    %10 = vector.broadcast %9 : vector<1x4xf32> to vector<160x4xf32>
    %11 = arith.addf %8, %10 : vector<160x4xf32>
    %cst = arith.constant 0.000000e+00 : f32
    %12 = vector.broadcast %cst : f32 to vector<160x4xf32>
    %13 = arith.maximumf %11, %12 : vector<160x4xf32>
    %c0_6 = arith.constant 0 : index
    %c0_7 = arith.constant 0 : index
    %14 = vector.load %arg3[%c0_6, %c0_7] : memref<4x32xf32, #tpu.memory_space<vmem>>, vector<4x32xf32>
    %cst_8 = arith.constant dense<0.000000e+00> : vector<160x32xf32>
    %15 = tpu.matmul %13, %14, %cst_8 {dimension_numbers = #tpu.dot_dimension_numbers<[1], [0], [0], [1], [0, 0, 1, 1], [], []>} : vector<160x4xf32>, vector<4x32xf32>, vector<160x32xf32> -> vector<160x32xf32>
    %c0_9 = arith.constant 0 : index
    %c0_10 = arith.constant 0 : index
    %16 = vector.load %arg6[%c0_9, %c0_10] : memref<1x32xf32, #tpu.memory_space<vmem>>, vector<1x32xf32>
    %17 = vector.broadcast %16 : vector<1x32xf32> to vector<160x32xf32>
    %18 = arith.addf %15, %17 : vector<160x32xf32>
    %cst_11 = arith.constant 0.000000e+00 : f32
    %19 = vector.broadcast %cst_11 : f32 to vector<160x32xf32>
    %20 = arith.maximumf %18, %19 : vector<160x32xf32>
    %21 = vector.shape_cast %20 : vector<160x32xf32> to vector<10x16x32xf32>
    %c1_i32 = arith.constant 1 : i32
    %22 = arith.subi %1, %c1_i32 : i32
    %23 = tpu.iota {dimensions = array<i32: 0>} : vector<10x1x1xi32>
    %24 = vector.broadcast %22 : i32 to vector<10x1x1xi32>
    %25 = arith.addi %24, %23 : vector<10x1x1xi32>
    %c0_i32 = arith.constant 0 : i32
    %26 = vector.broadcast %c0_i32 : i32 to vector<10x1x1xi32>
    %27 = arith.cmpi sge, %25, %26 : vector<10x1x1xi32>
    %c16_i32 = arith.constant 16 : i32
    %28 = vector.broadcast %c16_i32 : i32 to vector<10x1x1xi32>
    %29 = arith.cmpi slt, %25, %28 : vector<10x1x1xi32>
    %30 = arith.andi %27, %29 : vector<10x1x1xi1>
    %cst_12 = arith.constant 0.000000e+00 : f32
    %31 = vector.shape_cast %30 : vector<10x1x1xi1> to vector<10x1x1xi1>
    %32 = vector.broadcast %31 : vector<10x1x1xi1> to vector<10x16x32xi1>
    %33 = vector.broadcast %cst_12 : f32 to vector<10x16x32xf32>
    %34 = arith.select %32, %21, %33 : vector<10x16x32xi1>, vector<10x16x32xf32>
    %c0_13 = arith.constant 0 : index
    %c1 = arith.constant 1 : index
    %c0_14 = arith.constant 0 : index
    %35 = vector.load %arg9[%c0_13, %c1, %c0_14] : memref<10x18x32xf32, #tpu.memory_space<vmem>>, vector<10x16x32xf32>
    tpu.vector_store %arg9[%c0_13, %c1, %c0_14], %34 {strides = array<i32>} : memref<10x18x32xf32, #tpu.memory_space<vmem>>, vector<10x16x32xf32>,
    %cst_15 = arith.constant 0.000000e+00 : f32
    %36 = vector.broadcast %cst_15 : f32 to vector<10x1x32xf32>
    %c0_16 = arith.constant 0 : index
    %c0_17 = arith.constant 0 : index
    %c0_18 = arith.constant 0 : index
    %37 = vector.load %arg9[%c0_16, %c0_17, %c0_18] : memref<10x18x32xf32, #tpu.memory_space<vmem>>, vector<10x1x32xf32>
    tpu.vector_store %arg9[%c0_16, %c0_17, %c0_18], %36 {strides = array<i32>} : memref<10x18x32xf32, #tpu.memory_space<vmem>>, vector<10x1x32xf32>,
    %c0_19 = arith.constant 0 : index
    %c17 = arith.constant 17 : index
    %c0_20 = arith.constant 0 : index
    %38 = vector.load %arg9[%c0_19, %c17, %c0_20] : memref<10x18x32xf32, #tpu.memory_space<vmem>>, vector<10x1x32xf32>
    tpu.vector_store %arg9[%c0_19, %c17, %c0_20], %36 {strides = array<i32>} : memref<10x18x32xf32, #tpu.memory_space<vmem>>, vector<10x1x32xf32>,
    %cst_21 = arith.constant 0.000000e+00 : f32
    %39 = vector.broadcast %cst_21 : f32 to vector<128x8xf32>
    %c0_22 = arith.constant 0 : index
    %c0_23 = arith.constant 0 : index
    %c0_24 = arith.constant 0 : index
    %40 = vector.load %arg9[%c0_22, %c0_23, %c0_24] : memref<10x18x32xf32, #tpu.memory_space<vmem>>, vector<8x16x32xf32>
    %41 = vector.shape_cast %40 : vector<8x16x32xf32> to vector<128x32xf32>
    %c0_25 = arith.constant 0 : index
    %c0_26 = arith.constant 0 : index
    %42 = vector.load %arg7[%c0_25, %c0_26] : memref<288x8xf32, #tpu.memory_space<vmem>>, vector<32x8xf32>
    %cst_27 = arith.constant dense<0.000000e+00> : vector<128x8xf32>
    %43 = tpu.matmul %41, %42, %cst_27 {dimension_numbers = #tpu.dot_dimension_numbers<[1], [0], [0], [1], [0, 0, 1, 1], [], []>} : vector<128x32xf32>, vector<32x8xf32>, vector<128x8xf32> -> vector<128x8xf32>
    %44 = arith.addf %39, %43 : vector<128x8xf32>
    %c0_28 = arith.constant 0 : index
    %c1_29 = arith.constant 1 : index
    %c0_30 = arith.constant 0 : index
    %45 = vector.load %arg9[%c0_28, %c1_29, %c0_30] : memref<10x18x32xf32, #tpu.memory_space<vmem>>, vector<8x16x32xf32>
    %46 = vector.shape_cast %45 : vector<8x16x32xf32> to vector<128x32xf32>
    %c32 = arith.constant 32 : index
    %c0_31 = arith.constant 0 : index
    %47 = vector.load %arg7[%c32, %c0_31] : memref<288x8xf32, #tpu.memory_space<vmem>>, vector<32x8xf32>
    %cst_32 = arith.constant dense<0.000000e+00> : vector<128x8xf32>
    %48 = tpu.matmul %46, %47, %cst_32 {dimension_numbers = #tpu.dot_dimension_numbers<[1], [0], [0], [1], [0, 0, 1, 1], [], []>} : vector<128x32xf32>, vector<32x8xf32>, vector<128x8xf32> -> vector<128x8xf32>
    %49 = arith.addf %44, %48 : vector<128x8xf32>
    %c0_33 = arith.constant 0 : index
    %c2 = arith.constant 2 : index
    %c0_34 = arith.constant 0 : index
    %50 = vector.load %arg9[%c0_33, %c2, %c0_34] : memref<10x18x32xf32, #tpu.memory_space<vmem>>, vector<8x16x32xf32>
    %51 = vector.shape_cast %50 : vector<8x16x32xf32> to vector<128x32xf32>
    %c64 = arith.constant 64 : index
    %c0_35 = arith.constant 0 : index
    %52 = vector.load %arg7[%c64, %c0_35] : memref<288x8xf32, #tpu.memory_space<vmem>>, vector<32x8xf32>
    %cst_36 = arith.constant dense<0.000000e+00> : vector<128x8xf32>
    %53 = tpu.matmul %51, %52, %cst_36 {dimension_numbers = #tpu.dot_dimension_numbers<[1], [0], [0], [1], [0, 0, 1, 1], [], []>} : vector<128x32xf32>, vector<32x8xf32>, vector<128x8xf32> -> vector<128x8xf32>
    %54 = arith.addf %49, %53 : vector<128x8xf32>
    %c1_37 = arith.constant 1 : index
    %c0_38 = arith.constant 0 : index
    %c0_39 = arith.constant 0 : index
    %55 = vector.load %arg9[%c1_37, %c0_38, %c0_39] : memref<10x18x32xf32, #tpu.memory_space<vmem>>, vector<8x16x32xf32>
    %56 = vector.shape_cast %55 : vector<8x16x32xf32> to vector<128x32xf32>
    %c96 = arith.constant 96 : index
    %c0_40 = arith.constant 0 : index
    %57 = vector.load %arg7[%c96, %c0_40] : memref<288x8xf32, #tpu.memory_space<vmem>>, vector<32x8xf32>
    %cst_41 = arith.constant dense<0.000000e+00> : vector<128x8xf32>
    %58 = tpu.matmul %56, %57, %cst_41 {dimension_numbers = #tpu.dot_dimension_numbers<[1], [0], [0], [1], [0, 0, 1, 1], [], []>} : vector<128x32xf32>, vector<32x8xf32>, vector<128x8xf32> -> vector<128x8xf32>
    %59 = arith.addf %54, %58 : vector<128x8xf32>
    %c1_42 = arith.constant 1 : index
    %c1_43 = arith.constant 1 : index
    %c0_44 = arith.constant 0 : index
    %60 = vector.load %arg9[%c1_42, %c1_43, %c0_44] : memref<10x18x32xf32, #tpu.memory_space<vmem>>, vector<8x16x32xf32>
    %61 = vector.shape_cast %60 : vector<8x16x32xf32> to vector<128x32xf32>
    %c128 = arith.constant 128 : index
    %c0_45 = arith.constant 0 : index
    %62 = vector.load %arg7[%c128, %c0_45] : memref<288x8xf32, #tpu.memory_space<vmem>>, vector<32x8xf32>
    %cst_46 = arith.constant dense<0.000000e+00> : vector<128x8xf32>
    %63 = tpu.matmul %61, %62, %cst_46 {dimension_numbers = #tpu.dot_dimension_numbers<[1], [0], [0], [1], [0, 0, 1, 1], [], []>} : vector<128x32xf32>, vector<32x8xf32>, vector<128x8xf32> -> vector<128x8xf32>
    %64 = arith.addf %59, %63 : vector<128x8xf32>
    %c1_47 = arith.constant 1 : index
    %c2_48 = arith.constant 2 : index
    %c0_49 = arith.constant 0 : index
    %65 = vector.load %arg9[%c1_47, %c2_48, %c0_49] : memref<10x18x32xf32, #tpu.memory_space<vmem>>, vector<8x16x32xf32>
    %66 = vector.shape_cast %65 : vector<8x16x32xf32> to vector<128x32xf32>
    %c160 = arith.constant 160 : index
    %c0_50 = arith.constant 0 : index
    %67 = vector.load %arg7[%c160, %c0_50] : memref<288x8xf32, #tpu.memory_space<vmem>>, vector<32x8xf32>
    %cst_51 = arith.constant dense<0.000000e+00> : vector<128x8xf32>
    %68 = tpu.matmul %66, %67, %cst_51 {dimension_numbers = #tpu.dot_dimension_numbers<[1], [0], [0], [1], [0, 0, 1, 1], [], []>} : vector<128x32xf32>, vector<32x8xf32>, vector<128x8xf32> -> vector<128x8xf32>
    %69 = arith.addf %64, %68 : vector<128x8xf32>
    %c2_52 = arith.constant 2 : index
    %c0_53 = arith.constant 0 : index
    %c0_54 = arith.constant 0 : index
    %70 = vector.load %arg9[%c2_52, %c0_53, %c0_54] : memref<10x18x32xf32, #tpu.memory_space<vmem>>, vector<8x16x32xf32>
    %71 = vector.shape_cast %70 : vector<8x16x32xf32> to vector<128x32xf32>
    %c192 = arith.constant 192 : index
    %c0_55 = arith.constant 0 : index
    %72 = vector.load %arg7[%c192, %c0_55] : memref<288x8xf32, #tpu.memory_space<vmem>>, vector<32x8xf32>
    %cst_56 = arith.constant dense<0.000000e+00> : vector<128x8xf32>
    %73 = tpu.matmul %71, %72, %cst_56 {dimension_numbers = #tpu.dot_dimension_numbers<[1], [0], [0], [1], [0, 0, 1, 1], [], []>} : vector<128x32xf32>, vector<32x8xf32>, vector<128x8xf32> -> vector<128x8xf32>
    %74 = arith.addf %69, %73 : vector<128x8xf32>
    %c2_57 = arith.constant 2 : index
    %c1_58 = arith.constant 1 : index
    %c0_59 = arith.constant 0 : index
    %75 = vector.load %arg9[%c2_57, %c1_58, %c0_59] : memref<10x18x32xf32, #tpu.memory_space<vmem>>, vector<8x16x32xf32>
    %76 = vector.shape_cast %75 : vector<8x16x32xf32> to vector<128x32xf32>
    %c224 = arith.constant 224 : index
    %c0_60 = arith.constant 0 : index
    %77 = vector.load %arg7[%c224, %c0_60] : memref<288x8xf32, #tpu.memory_space<vmem>>, vector<32x8xf32>
    %cst_61 = arith.constant dense<0.000000e+00> : vector<128x8xf32>
    %78 = tpu.matmul %76, %77, %cst_61 {dimension_numbers = #tpu.dot_dimension_numbers<[1], [0], [0], [1], [0, 0, 1, 1], [], []>} : vector<128x32xf32>, vector<32x8xf32>, vector<128x8xf32> -> vector<128x8xf32>
    %79 = arith.addf %74, %78 : vector<128x8xf32>
    %c2_62 = arith.constant 2 : index
    %c2_63 = arith.constant 2 : index
    %c0_64 = arith.constant 0 : index
    %80 = vector.load %arg9[%c2_62, %c2_63, %c0_64] : memref<10x18x32xf32, #tpu.memory_space<vmem>>, vector<8x16x32xf32>
    %81 = vector.shape_cast %80 : vector<8x16x32xf32> to vector<128x32xf32>
    %c256 = arith.constant 256 : index
    %c0_65 = arith.constant 0 : index
    %82 = vector.load %arg7[%c256, %c0_65] : memref<288x8xf32, #tpu.memory_space<vmem>>, vector<32x8xf32>
    %cst_66 = arith.constant dense<0.000000e+00> : vector<128x8xf32>
    %83 = tpu.matmul %81, %82, %cst_66 {dimension_numbers = #tpu.dot_dimension_numbers<[1], [0], [0], [1], [0, 0, 1, 1], [], []>} : vector<128x32xf32>, vector<32x8xf32>, vector<128x8xf32> -> vector<128x8xf32>
    %84 = arith.addf %79, %83 : vector<128x8xf32>
    %85 = tpu.transpose %84, [1, 0] : vector<128x8xf32> -> vector<8x128xf32>
    %c0_67 = arith.constant 0 : index
    %c0_68 = arith.constant 0 : index
    %c0_69 = arith.constant 0 : index
    %86 = vector.load %arg8[%c0_67, %c0_68, %c0_69] : memref<1x8x128xf32, #tpu.memory_space<vmem>>, vector<1x8x128xf32>
    %87 = vector.shape_cast %86 : vector<1x8x128xf32> to vector<8x128xf32>
    %88 = vector.shape_cast %85 : vector<8x128xf32> to vector<1x8x128xf32>
    tpu.vector_store %arg8[%c0_67, %c0_68, %c0_69], %88 {strides = array<i32>} : memref<1x8x128xf32, #tpu.memory_space<vmem>>, vector<1x8x128xf32>,
    return
  }
  func.func @transform_0(%arg0: i32, %arg1: i32) -> (i32, i32, i32, i32) {
    %c0_i32 = arith.constant 0 : i32
    %c0_i32_0 = arith.constant 0 : i32
    %c0_i32_1 = arith.constant 0 : i32
    %c0_i32_2 = arith.constant 0 : i32
    return %arg0, %c0_i32, %c0_i32_0, %c0_i32_1 : i32, i32, i32, i32
  }
  func.func @transform_1(%arg0: i32, %arg1: i32) -> (i32, i32) {
    %c0_i32 = arith.constant 0 : i32
    %c0_i32_0 = arith.constant 0 : i32
    %c0_i32_1 = arith.constant 0 : i32
    return %c0_i32, %c0_i32_0 : i32, i32
  }
  func.func @transform_2(%arg0: i32, %arg1: i32) -> (i32, i32) {
    %c0_i32 = arith.constant 0 : i32
    %c0_i32_0 = arith.constant 0 : i32
    %c0_i32_1 = arith.constant 0 : i32
    return %c0_i32, %c0_i32_0 : i32, i32
  }
  func.func @transform_3(%arg0: i32, %arg1: i32) -> (i32, i32) {
    %c0_i32 = arith.constant 0 : i32
    %c0_i32_0 = arith.constant 0 : i32
    %c0_i32_1 = arith.constant 0 : i32
    return %c0_i32, %c0_i32_0 : i32, i32
  }
  func.func @transform_4(%arg0: i32, %arg1: i32) -> (i32, i32) {
    %c0_i32 = arith.constant 0 : i32
    %c0_i32_0 = arith.constant 0 : i32
    %c0_i32_1 = arith.constant 0 : i32
    return %c0_i32, %c0_i32_0 : i32, i32
  }
  func.func @transform_5(%arg0: i32, %arg1: i32) -> (i32, i32) {
    %c0_i32 = arith.constant 0 : i32
    %c0_i32_0 = arith.constant 0 : i32
    %c0_i32_1 = arith.constant 0 : i32
    return %c0_i32, %c0_i32_0 : i32, i32
  }
  func.func @transform_6(%arg0: i32, %arg1: i32) -> (i32, i32, i32) {
    %c0_i32 = arith.constant 0 : i32
    %c0_i32_0 = arith.constant 0 : i32
    return %arg0, %c0_i32, %arg1 : i32, i32, i32
  }
}

</mosaic_0001>

<llo_original>
// kernel: tpu_custom_call.1
$region0: #{tpu_custom_call.1}
  #allocation0 [shape = 'u32[]', space=smem, size = 0x4, offset = 0x4, fixed_abs, tag = 'smem constant byte address 0x4 - core index']
  #allocation1 [shape = 'u32[144,128]{1,0:T(1,128)}', space=vmem, size = 0x12000, scoped, tag = 'internal scratch']
  #allocation2 [shape = 'f32[10,18,32]{2,1,0:T(8,128)}', space=vmem, size = 0x1e000, scoped, tag = 'scratch operand']
  %s0 = inlined_call_operand.vmem [shape: f32[2,18,16,4], index: 0, kind: input, shape index: {}]
  %s1 = inlined_call_operand.vmem [shape: f32[4,32], index: 1, kind: input, shape index: {}]
  %s2 = inlined_call_operand.vmem [shape: f32[1,4], index: 2, kind: input, shape index: {}]
  %s3 = inlined_call_operand.vmem [shape: f32[1,4], index: 3, kind: input, shape index: {}]
  %s4 = inlined_call_operand.vmem [shape: f32[1,32], index: 4, kind: input, shape index: {}]
  %s5 = inlined_call_operand.vmem [shape: f32[288,8], index: 5, kind: input, shape index: {}]
  %s6 = inlined_call_operand.hbm [shape: f32[2,8,256], index: 6, kind: output, shape index: {}]
  %s7 = sld [smem:[#allocation0]]
  $region57: #{tpu_custom_call.1} parent=0
    _
  %s9 = ssub.s32 1, %s7
  %s10 = scalar_select 0, %s9, %s7
  $region1: #{tpu_custom_call.1} parent=0
    #allocation3 [shape = 'u8[8192]{0}', space=vmem, size = 0x2000, scoped, tag = 'output window, operand 0']
    #allocation4 [shape = 's32[2]{0}', space=sflag, size = 0x8, scoped, tag = 'scoped memory for tpu_custom_call.1']
    %11 = vsyncpa [#allocation4], 0
    %s12 = scalar_lea.sflag [#allocation4], 1
    %13 = vsyncpa %s12, 0
    loop: start=0, step=1, limit=6
    $region2: #{tpu_custom_call.1} parent=1 // loop_pre_header
      _
    $region3: #{tpu_custom_call.1} parent=1 // loop_header
      %s15 = sphi 0, %s19
      %p16 = scmp.ge.s32.totalorder %s15, 6
      %s22 = sphi 0, %s34
      %s23 = sphi 0, %s30
      %s24 = sphi 0, %s22
      %s25 = sphi 0, %s23
      %s26 = sphi 0, %s24
      %s27 = sphi 0, %s25
      %s37 = sphi 0, %s39
      %s40 = sphi 0, %s37
      %s41 = sphi 0, %s40
      %s57 = sphi 0, %s41
      %s61 = sphi 0, %s61
      %s63 = sphi 0, %s61
      %s64 = sphi 0, %s63
      %s78 = sphi 0, %s64
      %s82 = sphi 0, %s82
      %s84 = sphi 0, %s82
      %s85 = sphi 0, %s84
      %s99 = sphi 0, %s85
      %s103 = sphi 0, %s103
      %s105 = sphi 0, %s103
      %s106 = sphi 0, %s105
      %s120 = sphi 0, %s106
      %s124 = sphi 0, %s124
      %s126 = sphi 0, %s124
      %s127 = sphi 0, %s126
      %s141 = sphi 0, %s127
      %s145 = sphi 0, %s145
      %s147 = sphi 0, %s145
      %s148 = sphi 0, %s147
      %s162 = sphi 0, %s148
      %s170 = sphi 0, %s172
      %s173 = sphi 0, %s170
      %s174 = sphi 0, %s173
      %s190 = sphi 0, %s174
    $region4: #{tpu_custom_call.1} parent=1 // loop_header_branch
      %18 = sbr.rel (%p16) target = $region8
    $region5: #{tpu_custom_call.1} parent=1 // loop_body
      %s20 = ssub.s32 %s15, 1
      %s21 = ssub.s32 %s15, 2
      %s28 = sadd.s32 1, %s23
      %p29 = scmp.ge.s32.totalorder %s28, 2
      %s30 = scalar_select %p29, 0, %s28
      %s31 = sadd.s32 1, %s22
      %s32 = scalar_select %p29, %s31, %s22
      %p33 = scmp.ge.s32.totalorder %s32, 2
      %s34 = scalar_select %p33, 0, %s32
      %s35 = ssub.s32 %s22, %s34
      %p36 = scmp.eq.s32.totalorder %s35, 0
      %s38 = sadd.s32 %s37, 1
      %s39 = scalar_select %p36, %s37, %s38
      %p42 = pneg %p36
      %p43 = scmp.eq.s32.totalorder %s15, 3
      %p44 = por %p42, %p43
      %p45 = scmp.ne.s32.totalorder %s37, %s40
      %p46 = scmp.eq.s32.totalorder %s15, 0
      %p47 = por %p45, %p46
      %p48 = scmp.ne.s32.totalorder %s37, %s40
      %p49 = scmp.eq.s32.totalorder %s20, 3
      %p50 = por %p48, %p49
      %p51 = scmp.ne.s32.totalorder %s40, %s41
      %p52 = scmp.eq.s32.totalorder %s20, 0
      %p53 = por %p51, %p52
      %p54 = scmp.ne.s32.totalorder %s40, %s41
      %p55 = scmp.eq.s32.totalorder %s21, 3
      %p56 = por %p54, %p55
      %p58 = scmp.ne.s32.totalorder %s41, %s57
      %p59 = scmp.eq.s32.totalorder %s21, 0
      %p60 = por %p58, %p59
      %s62 = sadd.s32 %s61, 1
      %p65 = scmp.eq.s32.totalorder %s15, 3
      %p66 = scmp.ne.s32.totalorder %s61, %s63
      %p67 = scmp.eq.s32.totalorder %s15, 0
      %p68 = por %p66, %p67
      %p69 = scmp.ne.s32.totalorder %s61, %s63
      %p70 = scmp.eq.s32.totalorder %s20, 3
      %p71 = por %p69, %p70
      %p72 = scmp.ne.s32.totalorder %s63, %s64
      %p73 = scmp.eq.s32.totalorder %s20, 0
      %p74 = por %p72, %p73
      %p75 = scmp.ne.s32.totalorder %s63, %s64
      %p76 = scmp.eq.s32.totalorder %s21, 3
      %p77 = por %p75, %p76
      %p79 = scmp.ne.s32.totalorder %s64, %s78
      %p80 = scmp.eq.s32.totalorder %s21, 0
      %p81 = por %p79, %p80
      %s83 = sadd.s32 %s82, 1
      %p86 = scmp.eq.s32.totalorder %s15, 3
      %p87 = scmp.ne.s32.totalorder %s82, %s84
      %p88 = scmp.eq.s32.totalorder %s15, 0
      %p89 = por %p87, %p88
      %p90 = scmp.ne.s32.totalorder %s82, %s84
      %p91 = scmp.eq.s32.totalorder %s20, 3
      %p92 = por %p90, %p91
      %p93 = scmp.ne.s32.totalorder %s84, %s85
      %p94 = scmp.eq.s32.totalorder %s20, 0
      %p95 = por %p93, %p94
      %p96 = scmp.ne.s32.totalorder %s84, %s85
      %p97 = scmp.eq.s32.totalorder %s21, 3
      %p98 = por %p96, %p97
      %p100 = scmp.ne.s32.totalorder %s85, %s99
      %p101 = scmp.eq.s32.totalorder %s21, 0
      %p102 = por %p100, %p101
      %s104 = sadd.s32 %s103, 1
      %p107 = scmp.eq.s32.totalorder %s15, 3
      %p108 = scmp.ne.s32.totalorder %s103, %s105
      %p109 = scmp.eq.s32.totalorder %s15, 0
      %p110 = por %p108, %p109
      %p111 = scmp.ne.s32.totalorder %s103, %s105
      %p112 = scmp.eq.s32.totalorder %s20, 3
      %p113 = por %p111, %p112
      %p114 = scmp.ne.s32.totalorder %s105, %s106
      %p115 = scmp.eq.s32.totalorder %s20, 0
      %p116 = por %p114, %p115
      %p117 = scmp.ne.s32.totalorder %s105, %s106
      %p118 = scmp.eq.s32.totalorder %s21, 3
      %p119 = por %p117, %p118
      %p121 = scmp.ne.s32.totalorder %s106, %s120
      %p122 = scmp.eq.s32.totalorder %s21, 0
      %p123 = por %p121, %p122
      %s125 = sadd.s32 %s124, 1
      %p128 = scmp.eq.s32.totalorder %s15, 3
      %p129 = scmp.ne.s32.totalorder %s124, %s126
      %p130 = scmp.eq.s32.totalorder %s15, 0
      %p131 = por %p129, %p130
      %p132 = scmp.ne.s32.totalorder %s124, %s126
      %p133 = scmp.eq.s32.totalorder %s20, 3
      %p134 = por %p132, %p133
      %p135 = scmp.ne.s32.totalorder %s126, %s127
      %p136 = scmp.eq.s32.totalorder %s20, 0
      %p137 = por %p135, %p136
      %p138 = scmp.ne.s32.totalorder %s126, %s127
      %p139 = scmp.eq.s32.totalorder %s21, 3
      %p140 = por %p138, %p139
      %p142 = scmp.ne.s32.totalorder %s127, %s141
      %p143 = scmp.eq.s32.totalorder %s21, 0
      %p144 = por %p142, %p143
      %s146 = sadd.s32 %s145, 1
      %p149 = scmp.eq.s32.totalorder %s15, 3
      %p150 = scmp.ne.s32.totalorder %s145, %s147
      %p151 = scmp.eq.s32.totalorder %s15, 0
      %p152 = por %p150, %p151
      %p153 = scmp.ne.s32.totalorder %s145, %s147
      %p154 = scmp.eq.s32.totalorder %s20, 3
      %p155 = por %p153, %p154
      %p156 = scmp.ne.s32.totalorder %s147, %s148
      %p157 = scmp.eq.s32.totalorder %s20, 0
      %p158 = por %p156, %p157
      %p159 = scmp.ne.s32.totalorder %s147, %s148
      %p160 = scmp.eq.s32.totalorder %s21, 3
      %p161 = por %p159, %p160
      %p163 = scmp.ne.s32.totalorder %s148, %s162
      %p164 = scmp.eq.s32.totalorder %s21, 0
      %p165 = por %p163, %p164
      %s166 = ssub.s32 %s22, %s34
      %s167 = ssub.s32 %s23, %s30
      %s168 = sor.u32 %s166, %s167
      %p169 = scmp.eq.s32.totalorder %s168, 0
      %s171 = sadd.s32 %s170, 1
      %s172 = scalar_select %p169, %s170, %s171
      %p175 = pneg %p169
      %p176 = scmp.eq.s32.totalorder %s15, 3
      %p177 = por %p175, %p176
      %p178 = scmp.ne.s32.totalorder %s170, %s173
      %p179 = scmp.eq.s32.totalorder %s15, 0
      %p180 = por %p178, %p179
      %p181 = scmp.ne.s32.totalorder %s170, %s173
      %p182 = scmp.eq.s32.totalorder %s20, 3
      %p183 = por %p181, %p182
      %p184 = scmp.ne.s32.totalorder %s173, %s174
      %p185 = scmp.eq.s32.totalorder %s20, 0
      %p186 = por %p184, %p185
      %p187 = scmp.ne.s32.totalorder %s173, %s174
      %p188 = scmp.eq.s32.totalorder %s21, 3
      %p189 = por %p187, %p188
      %p191 = scmp.ne.s32.totalorder %s174, %s190
      %p192 = scmp.eq.s32.totalorder %s21, 0
      %p193 = por %p191, %p192
      %p194 = scmp.le.s32.totalorder 1, %s15
      %p195 = scmp.lt.s32.totalorder %s15, 5
      %p196 = pnand %p194, %p195
      %p197 = pneg %p196
      // Predicated region
      $region9: #{tpu_custom_call.1} parent=5 // pred_check
        _
      $region10: #{tpu_custom_call.1} parent=5 // pred_check_branch
        %199 = sbr.rel (%p196) target = $region12
      $region11: #{tpu_custom_call.1} parent=5 // pred_region
        %s200 = ssub.s32 %s15, 1
        // Predicated region
        $region13: #{tpu_custom_call.1} parent=11 // pred_check
          %p201 = pneg %p74
        $region14: #{tpu_custom_call.1} parent=11 // pred_check_branch
          %203 = sbr.rel (%p201) target = $region16
        $region15: #{tpu_custom_call.1} parent=11 // pred_region
          _
        $region16: #{tpu_custom_call.1} parent=11 // pred_fallthru
          _
        // Predicated region
        $region17: #{tpu_custom_call.1} parent=11 // pred_check
          %p204 = pneg %p95
        $region18: #{tpu_custom_call.1} parent=11 // pred_check_branch
          %206 = sbr.rel (%p204) target = $region20
        $region19: #{tpu_custom_call.1} parent=11 // pred_region
          _
        $region20: #{tpu_custom_call.1} parent=11 // pred_fallthru
          _
        // Predicated region
        $region21: #{tpu_custom_call.1} parent=11 // pred_check
          %p207 = pneg %p116
        $region22: #{tpu_custom_call.1} parent=11 // pred_check_branch
          %209 = sbr.rel (%p207) target = $region24
        $region23: #{tpu_custom_call.1} parent=11 // pred_region
          _
        $region24: #{tpu_custom_call.1} parent=11 // pred_fallthru
          _
        // Predicated region
        $region25: #{tpu_custom_call.1} parent=11 // pred_check
          %p210 = pneg %p137
        $region26: #{tpu_custom_call.1} parent=11 // pred_check_branch
          %212 = sbr.rel (%p210) target = $region28
        $region27: #{tpu_custom_call.1} parent=11 // pred_region
          _
        $region28: #{tpu_custom_call.1} parent=11 // pred_fallthru
          _
        // Predicated region
        $region29: #{tpu_custom_call.1} parent=11 // pred_check
          %p213 = pneg %p158
        $region30: #{tpu_custom_call.1} parent=11 // pred_check_branch
          %215 = sbr.rel (%p213) target = $region32
        $region31: #{tpu_custom_call.1} parent=11 // pred_region
          _
        $region32: #{tpu_custom_call.1} parent=11 // pred_fallthru
          _
      $region12: #{tpu_custom_call.1} parent=5 // pred_fallthru
        _
      %p216 = scmp.lt.s32.totalorder %s15, 4
      // Predicated region
      $region33: #{tpu_custom_call.1} parent=5 // pred_check
        %p217 = pneg %p216
      $region34: #{tpu_custom_call.1} parent=5 // pred_check_branch
        %219 = sbr.rel (%p217) target = $region36
      $region35: #{tpu_custom_call.1} parent=5 // pred_region
        // Predicated region
        $region37: #{tpu_custom_call.1} parent=35 // pred_check
          %p220 = pneg %p47
        $region38: #{tpu_custom_call.1} parent=35 // pred_check_branch
          %222 = sbr.rel (%p220) target = $region40
        $region39: #{tpu_custom_call.1} parent=35 // pred_region
          %p223 = scmp.lt.s32.totalorder %s22, 1
          %s224 = scalar_select %p223, %s22, 1
          %s225 = smul.addr %s224, 36
          %s226 = smul.addr %s225, 8
          %s227 = scalar_lea.vmem %s0, %s226
        $region40: #{tpu_custom_call.1} parent=35 // pred_fallthru
          _
      $region36: #{tpu_custom_call.1} parent=5 // pred_fallthru
        _
      %p228 = scmp.le.s32.totalorder 1, %s15
      %p229 = scmp.lt.s32.totalorder %s15, 5
      %p230 = pnand %p228, %p229
      %p231 = pneg %p230
      // Predicated region
      $region41: #{tpu_custom_call.1} parent=5 // pred_check
        _
      $region42: #{tpu_custom_call.1} parent=5 // pred_check_branch
        %233 = sbr.rel (%p230) target = $region44
      $region43: #{tpu_custom_call.1} parent=5 // pred_region
        %s234 = ssub.s32 %s15, 1
        %p235 = scmp.lt.s32.totalorder %s24, 1
        %s236 = scalar_select %p235, %s24, 1
        %s237 = smul.addr %s236, 36
        %s238 = smul.addr %s237, 8
        %s239 = scalar_lea.vmem %s0, %s238
        %p240 = pneg %p53
        %p241 = pneg %p50
        %p242 = pneg %p74
        %p243 = pneg %p71
        %p244 = pneg %p95
        %p245 = pneg %p92
        %p246 = pneg %p116
        %p247 = pneg %p113
        %p248 = pneg %p137
        %p249 = pneg %p134
        %p250 = pneg %p158
        %p251 = pneg %p155
        %p252 = pneg %p186
        %p253 = pneg %p183
        %s254 = sand.u32 %s173, 1
        %s255 = scalar_lea.sflag [#allocation4], %s254
        %s256 = sand.u32 %s173, 1
        %s257 = smul.addr %s256, 8
        %s258 = scalar_lea.vmem [#allocation3], %s257
        %p259 = scmp.lt.s32.totalorder %s24, 1
        %s260 = scalar_select %p259, %s24, 1
        %s261 = smul.addr %s260, 36
        %s262 = smul.addr %s261, 8
        %s263 = scalar_lea.vmem %s0, %s262
        %s264 = smul.u32 %s25, 8
        %s265 = smul.u32 %s264, 16
        %s266 = scalar_lea.vmem %s263, %s265
        %v267 = vld [vmem:[%s266] sm:$0xff]
        %v268 = vld [vmem:[%s266 + $0x8] sm:$0xff]
        %v269 = vld [vmem:[%s266 + $0x10] sm:$0xff]
        %v270 = vld [vmem:[%s266 + $0x18] sm:$0xff]
        %v271 = vld [vmem:[%s266 + $0x20] sm:$0xff]
        %v272 = vld [vmem:[%s266 + $0x28] sm:$0xff]
        %v273 = vld [vmem:[%s266 + $0x30] sm:$0xff]
        %v274 = vld [vmem:[%s266 + $0x38] sm:$0xff]
        %v275 = vld [vmem:[%s266 + $0x40] sm:$0xff]
        %v276 = vld [vmem:[%s266 + $0x48] sm:$0xff]
        %v277 = vld [vmem:[%s266 + $0x50] sm:$0xff]
        %v278 = vld [vmem:[%s266 + $0x58] sm:$0xff]
        %v279 = vld [vmem:[%s266 + $0x60] sm:$0xff]
        %v280 = vld [vmem:[%s266 + $0x68] sm:$0xff]
        %v281 = vld [vmem:[%s266 + $0x70] sm:$0xff]
        %v282 = vld [vmem:[%s266 + $0x78] sm:$0xff]
        %v283 = vld [vmem:[%s266 + $0x80] sm:$0xff]
        %v284 = vld [vmem:[%s266 + $0x88] sm:$0xff]
        %v285 = vld [vmem:[%s266 + $0x90] sm:$0xff]
        %v286 = vld [vmem:[%s266 + $0x98] sm:$0xff]
        %v287 = vld [vmem:[%s2] sm:$0x1]
        %v289 = vlaneseq
        %v290 = vshrl.u32 %v289, 7
        %v291 = vsub.s32 0, %v290
        %v292 = vrot.slane %v287, %v291
        %v294 = vmul.f32 %v267, %v292
        %v295 = vmul.f32 %v268, %v292
        %v296 = vmul.f32 %v269, %v292
        %v297 = vmul.f32 %v270, %v292
        %v298 = vmul.f32 %v271, %v292
        %v299 = vmul.f32 %v272, %v292
        %v300 = vmul.f32 %v273, %v292
        %v301 = vmul.f32 %v274, %v292
        %v302 = vmul.f32 %v275, %v292
        %v303 = vmul.f32 %v276, %v292
        %v304 = vmul.f32 %v277, %v292
        %v305 = vmul.f32 %v278, %v292
        %v306 = vmul.f32 %v279, %v292
        %v307 = vmul.f32 %v280, %v292
        %v308 = vmul.f32 %v281, %v292
        %v309 = vmul.f32 %v282, %v292
        %v310 = vmul.f32 %v283, %v292
        %v311 = vmul.f32 %v284, %v292
        %v312 = vmul.f32 %v285, %v292
        %v313 = vmul.f32 %v286, %v292
        %v314 = vld [vmem:[%s3] sm:$0x1]
        %v316 = vlaneseq
        %v317 = vshrl.u32 %v316, 7
        %v318 = vsub.s32 0, %v317
        %v319 = vrot.slane %v314, %v318
        %v321 = vadd.f32 %v294, %v319
        %v322 = vadd.f32 %v295, %v319
        %v323 = vadd.f32 %v296, %v319
        %v324 = vadd.f32 %v297, %v319
        %v325 = vadd.f32 %v298, %v319
        %v326 = vadd.f32 %v299, %v319
        %v327 = vadd.f32 %v300, %v319
        %v328 = vadd.f32 %v301, %v319
        %v329 = vadd.f32 %v302, %v319
        %v330 = vadd.f32 %v303, %v319
        %v331 = vadd.f32 %v304, %v319
        %v332 = vadd.f32 %v305, %v319
        %v333 = vadd.f32 %v306, %v319
        %v334 = vadd.f32 %v307, %v319
        %v335 = vadd.f32 %v308, %v319
        %v336 = vadd.f32 %v309, %v319
        %v337 = vadd.f32 %v310, %v319
        %v338 = vadd.f32 %v311, %v319
        %v339 = vadd.f32 %v312, %v319
        %v340 = vadd.f32 %v313, %v319
        %v341 = vmax.f32 %v321, 0.0
        %v342 = vmax.f32 %v322, 0.0
        %v343 = vmax.f32 %v323, 0.0
        %v344 = vmax.f32 %v324, 0.0
        %v345 = vmax.f32 %v325, 0.0
        %v346 = vmax.f32 %v326, 0.0
        %v347 = vmax.f32 %v327, 0.0
        %v348 = vmax.f32 %v328, 0.0
        %v349 = vmax.f32 %v329, 0.0
        %v350 = vmax.f32 %v330, 0.0
        %v351 = vmax.f32 %v331, 0.0
        %v352 = vmax.f32 %v332, 0.0
        %v353 = vmax.f32 %v333, 0.0
        %v354 = vmax.f32 %v334, 0.0
        %v355 = vmax.f32 %v335, 0.0
        %v356 = vmax.f32 %v336, 0.0
        %v357 = vmax.f32 %v337, 0.0
        %v358 = vmax.f32 %v338, 0.0
        %v359 = vmax.f32 %v339, 0.0
        %v360 = vmax.f32 %v340, 0.0
        %v361 = vld [vmem:[%s1] sm:$0xf]
        %v362 = vld [vmem:[%s4] sm:$0x1]
        %v364 = vlaneseq
        %v365 = vshrl.u32 %v364, 7
        %v366 = vsub.s32 0, %v365
        %v367 = vrot.slane %v362, %v366
        %vm369 = vcmask 31744
        %v371 = vsel %vm369, %v341, 0
        %v374 = vsel %vm369, %v342, 0
        %v377 = vsel %vm369, %v343, 0
        %v380 = vsel %vm369, %v344, 0
        %v383 = vsel %vm369, %v345, 0
        %v386 = vsel %vm369, %v346, 0
        %v389 = vsel %vm369, %v347, 0
        %v392 = vsel %vm369, %v348, 0
        %v395 = vsel %vm369, %v349, 0
        %v398 = vsel %vm369, %v350, 0
        %v401 = vsel %vm369, %v351, 0
        %v404 = vsel %vm369, %v352, 0
        %v407 = vsel %vm369, %v353, 0
        %v410 = vsel %vm369, %v354, 0
        %v413 = vsel %vm369, %v355, 0
        %v416 = vsel %vm369, %v356, 0
        %v419 = vsel %vm369, %v357, 0
        %v422 = vsel %vm369, %v358, 0
        %v425 = vsel %vm369, %v359, 0
        %v428 = vsel %vm369, %v360, 0
        %vm430 = vcmask 1043456
        %v432 = vsel %vm430, %v361, 0
        %434 = vmatprep.subr.mxu0 0.0
        %435 = vmatpush1.msra.mxu0 0.0
        %436 = vmatprep.subr.mxu0 0.0
        %437 = vmatpush1.msra.mxu0 0.0
        %438 = vmatprep.subr.mxu0 0.0
        %439 = vmatpush1.msra.mxu0 0.0
        %440 = vmatprep.subr.mxu0 0.0
        %441 = vmatpush1.msra.mxu0 0.0
        %442 = vmatprep.subr.mxu0 0.0
        %443 = vmatpush1.msra.mxu0 0.0
        %444 = vmatprep.subr.mxu0 0.0
        %445 = vmatpush1.msra.mxu0 0.0
        %446 = vmatprep.subr.mxu0 0.0
        %447 = vmatpush1.msra.mxu0 0.0
        %448 = vmatprep.subr.mxu0 0.0
        %449 = vmatpush1.msra.mxu0 0.0
        %450 = vmatprep.subr.mxu0 0.0
        %451 = vmatpush1.msra.mxu0 0.0
        %452 = vmatprep.subr.mxu0 0.0
        %453 = vmatpush1.msra.mxu0 0.0
        %454 = vmatprep.subr.mxu0 0.0
        %455 = vmatpush1.msra.mxu0 0.0
        %456 = vmatprep.subr.mxu0 0.0
        %457 = vmatpush1.msra.mxu0 0.0
        %458 = vmatprep.subr.mxu0 0.0
        %459 = vmatpush1.msra.mxu0 0.0
        %460 = vmatprep.subr.mxu0 0.0
        %461 = vmatpush1.msra.mxu0 0.0
        %462 = vmatprep.subr.mxu0 0.0
        %463 = vmatpush1.msra.mxu0 0.0
        %464 = vmatprep.subr.mxu0 0.0
        %465 = vmatpush1.msra.mxu0 %v432
        %466 = vmatprep.subr.mxu0 0.0
        %467 = vmatpush2.msra.mxu0 0.0
        %468 = vmatprep.subr.mxu0 0.0
        %469 = vmatpush2.msra.mxu0 0.0
        %470 = vmatprep.subr.mxu0 0.0
        %471 = vmatpush2.msra.mxu0 0.0
        %472 = vmatprep.subr.mxu0 0.0
        %473 = vmatpush2.msra.mxu0 0.0
        %474 = vmatprep.subr.mxu0 0.0
        %475 = vmatpush2.msra.mxu0 0.0
        %476 = vmatprep.subr.mxu0 0.0
        %477 = vmatpush2.msra.mxu0 0.0
        %478 = vmatprep.subr.mxu0 0.0
        %479 = vmatpush2.msra.mxu0 0.0
        %480 = vmatprep.subr.mxu0 0.0
        %481 = vmatpush2.msra.mxu0 0.0
        %482 = vmatprep.subr.mxu0 0.0
        %483 = vmatpush2.msra.mxu0 0.0
        %484 = vmatprep.subr.mxu0 0.0
        %485 = vmatpush2.msra.mxu0 0.0
        %486 = vmatprep.subr.mxu0 0.0
        %487 = vmatpush2.msra.mxu0 0.0
        %488 = vmatprep.subr.mxu0 0.0
        %489 = vmatpush2.msra.mxu0 0.0
        %490 = vmatprep.subr.mxu0 0.0
        %491 = vmatpush2.msra.mxu0 0.0
        %492 = vmatprep.subr.mxu0 0.0
        %493 = vmatpush2.msra.mxu0 0.0
        %494 = vmatprep.subr.mxu0 0.0
        %495 = vmatpush2.msra.mxu0 0.0
        %496 = vmatprep.subr.mxu0 0.0
        %497 = vmatpush2.msra.mxu0 0.0
        %498 = vmatprep.mubr.f32.mxu0 0.0
        %499 = vmatmul.mubr.f32.gmra.mxu0 %v371
        %v500 = vpop.f32.mrf.mxu0
        %v501 = vadd.f32 %v367, %v500
        %v502 = vpop.f32.mrf.mxu0
        %503 = vmatprep.mubr.f32.mxu0 0.0
        %504 = vmatmul.mubr.f32.gmra.mxu0 %v374
        %v505 = vpop.f32.mrf.mxu0
        %v506 = vadd.f32 %v367, %v505
        %v507 = vpop.f32.mrf.mxu0
        %508 = vmatprep.mubr.f32.mxu0 0.0
        %509 = vmatmul.mubr.f32.gmra.mxu0 %v377
        %v510 = vpop.f32.mrf.mxu0
        %v511 = vadd.f32 %v367, %v510
        %v512 = vpop.f32.mrf.mxu0
        %513 = vmatprep.mubr.f32.mxu0 0.0
        %514 = vmatmul.mubr.f32.gmra.mxu0 %v380
        %v515 = vpop.f32.mrf.mxu0
        %v516 = vadd.f32 %v367, %v515
        %v517 = vpop.f32.mrf.mxu0
        %518 = vmatprep.mubr.f32.mxu0 0.0
        %519 = vmatmul.mubr.f32.gmra.mxu0 %v383
        %v520 = vpop.f32.mrf.mxu0
        %v521 = vadd.f32 %v367, %v520
        %v522 = vpop.f32.mrf.mxu0
        %523 = vmatprep.mubr.f32.mxu0 0.0
        %524 = vmatmul.mubr.f32.gmra.mxu0 %v386
        %v525 = vpop.f32.mrf.mxu0
        %v526 = vadd.f32 %v367, %v525
        %v527 = vpop.f32.mrf.mxu0
        %528 = vmatprep.mubr.f32.mxu0 0.0
        %529 = vmatmul.mubr.f32.gmra.mxu0 %v389
        %v530 = vpop.f32.mrf.mxu0
        %v531 = vadd.f32 %v367, %v530
        %v532 = vpop.f32.mrf.mxu0
        %533 = vmatprep.mubr.f32.mxu0 0.0
        %534 = vmatmul.mubr.f32.gmra.mxu0 %v392
        %v535 = vpop.f32.mrf.mxu0
        %v536 = vadd.f32 %v367, %v535
        %v537 = vpop.f32.mrf.mxu0
        %538 = vmatprep.mubr.f32.mxu0 0.0
        %539 = vmatmul.mubr.f32.gmra.mxu0 %v395
        %v540 = vpop.f32.mrf.mxu0
        %v541 = vadd.f32 %v367, %v540
        %v542 = vpop.f32.mrf.mxu0
        %543 = vmatprep.mubr.f32.mxu0 0.0
        %544 = vmatmul.mubr.f32.gmra.mxu0 %v398
        %v545 = vpop.f32.mrf.mxu0
        %v546 = vadd.f32 %v367, %v545
        %v547 = vpop.f32.mrf.mxu0
        %548 = vmatprep.mubr.f32.mxu0 0.0
        %549 = vmatmul.mubr.f32.gmra.mxu0 %v401
        %v550 = vpop.f32.mrf.mxu0
        %v551 = vadd.f32 %v367, %v550
        %v552 = vpop.f32.mrf.mxu0
        %553 = vmatprep.mubr.f32.mxu0 0.0
        %554 = vmatmul.mubr.f32.gmra.mxu0 %v404
        %v555 = vpop.f32.mrf.mxu0
        %v556 = vadd.f32 %v367, %v555
        %v557 = vpop.f32.mrf.mxu0
        %558 = vmatprep.mubr.f32.mxu0 0.0
        %559 = vmatmul.mubr.f32.gmra.mxu0 %v407
        %v560 = vpop.f32.mrf.mxu0
        %v561 = vadd.f32 %v367, %v560
        %v562 = vpop.f32.mrf.mxu0
        %563 = vmatprep.mubr.f32.mxu0 0.0
        %564 = vmatmul.mubr.f32.gmra.mxu0 %v410
        %v565 = vpop.f32.mrf.mxu0
        %v566 = vadd.f32 %v367, %v565
        %v567 = vpop.f32.mrf.mxu0
        %568 = vmatprep.mubr.f32.mxu0 0.0
        %569 = vmatmul.mubr.f32.gmra.mxu0 %v413
        %v570 = vpop.f32.mrf.mxu0
        %v571 = vadd.f32 %v367, %v570
        %v572 = vpop.f32.mrf.mxu0
        %573 = vmatprep.mubr.f32.mxu0 0.0
        %574 = vmatmul.mubr.f32.gmra.mxu0 %v416
        %v575 = vpop.f32.mrf.mxu0
        %v576 = vadd.f32 %v367, %v575
        %v577 = vpop.f32.mrf.mxu0
        %578 = vmatprep.mubr.f32.mxu0 0.0
        %579 = vmatmul.mubr.f32.gmra.mxu0 %v419
        %v580 = vpop.f32.mrf.mxu0
        %v581 = vadd.f32 %v367, %v580
        %v582 = vpop.f32.mrf.mxu0
        %583 = vmatprep.mubr.f32.mxu0 0.0
        %584 = vmatmul.mubr.f32.gmra.mxu0 %v422
        %v585 = vpop.f32.mrf.mxu0
        %v586 = vadd.f32 %v367, %v585
        %v587 = vpop.f32.mrf.mxu0
        %588 = vmatprep.mubr.f32.mxu0 0.0
        %589 = vmatmul.mubr.f32.gmra.mxu0 %v425
        %v590 = vpop.f32.mrf.mxu0
        %v591 = vadd.f32 %v367, %v590
        %v592 = vpop.f32.mrf.mxu0
        %593 = vmatprep.mubr.f32.mxu0 0.0
        %594 = vmatmul.mubr.f32.gmra.mxu0 %v428
        %v595 = vpop.f32.mrf.mxu0
        %v596 = vadd.f32 %v367, %v595
        %v597 = vpop.f32.mrf.mxu0
        %598 = vdwg.mxu0
        %v599 = vmax.f32 %v501, 0.0
        %v600 = vmax.f32 %v506, 0.0
        %v601 = vmax.f32 %v511, 0.0
        %v602 = vmax.f32 %v516, 0.0
        %v603 = vmax.f32 %v521, 0.0
        %v604 = vmax.f32 %v526, 0.0
        %v605 = vmax.f32 %v531, 0.0
        %v606 = vmax.f32 %v536, 0.0
        %v607 = vmax.f32 %v541, 0.0
        %v608 = vmax.f32 %v546, 0.0
        %v609 = vmax.f32 %v551, 0.0
        %v610 = vmax.f32 %v556, 0.0
        %v611 = vmax.f32 %v561, 0.0
        %v612 = vmax.f32 %v566, 0.0
        %v613 = vmax.f32 %v571, 0.0
        %v614 = vmax.f32 %v576, 0.0
        %v615 = vmax.f32 %v581, 0.0
        %v616 = vmax.f32 %v586, 0.0
        %v617 = vmax.f32 %v591, 0.0
        %v618 = vmax.f32 %v596, 0.0
        %s619 = ssub.s32 %s264, 1
        %v620 = vstv %s619
        %v621 = vadd.s32 %v620, 1
        %v622 = vadd.s32 %v620, 2
        %v623 = vadd.s32 %v620, 3
        %v624 = vadd.s32 %v620, 4
        %v625 = vadd.s32 %v620, 5
        %v626 = vadd.s32 %v620, 6
        %v627 = vadd.s32 %v620, 7
        %v628 = vadd.s32 %v620, 8
        %v629 = vadd.s32 %v620, 9
        %vm630 = vcmp.ge.s32.totalorder %v620, 0
        %vm631 = vcmp.ge.s32.totalorder %v621, 0
        %vm632 = vcmp.ge.s32.totalorder %v622, 0
        %vm633 = vcmp.ge.s32.totalorder %v623, 0
        %vm634 = vcmp.ge.s32.totalorder %v624, 0
        %vm635 = vcmp.ge.s32.totalorder %v625, 0
        %vm636 = vcmp.ge.s32.totalorder %v626, 0
        %vm637 = vcmp.ge.s32.totalorder %v627, 0
        %vm638 = vcmp.ge.s32.totalorder %v628, 0
        %vm639 = vcmp.ge.s32.totalorder %v629, 0
        %vm640 = vcmp.lt.s32.totalorder %v620, 16
        %vm641 = vcmp.lt.s32.totalorder %v621, 16
        %vm642 = vcmp.lt.s32.totalorder %v622, 16
        %vm643 = vcmp.lt.s32.totalorder %v623, 16
        %vm644 = vcmp.lt.s32.totalorder %v624, 16
        %vm645 = vcmp.lt.s32.totalorder %v625, 16
        %vm646 = vcmp.lt.s32.totalorder %v626, 16
        %vm647 = vcmp.lt.s32.totalorder %v627, 16
        %vm648 = vcmp.lt.s32.totalorder %v628, 16
        %vm649 = vcmp.lt.s32.totalorder %v629, 16
        %vm650 = vmand %vm630, %vm640
        %vm651 = vmand %vm631, %vm641
        %vm652 = vmand %vm632, %vm642
        %vm653 = vmand %vm633, %vm643
        %vm654 = vmand %vm634, %vm644
        %vm655 = vmand %vm635, %vm645
        %vm656 = vmand %vm636, %vm646
        %vm657 = vmand %vm637, %vm647
        %vm658 = vmand %vm638, %vm648
        %vm659 = vmand %vm639, %vm649
        %v660 = vsel %vm650, 1, 0
        %v661 = vsel %vm651, 1, 0
        %v662 = vsel %vm652, 1, 0
        %v663 = vsel %vm653, 1, 0
        %v664 = vsel %vm654, 1, 0
        %v665 = vsel %vm655, 1, 0
        %v666 = vsel %vm656, 1, 0
        %v667 = vsel %vm657, 1, 0
        %v668 = vsel %vm658, 1, 0
        %v669 = vsel %vm659, 1, 0
        %vm670 = vcmp.eq.s32.totalorder %v660, 1
        %vm671 = vcmp.eq.s32.totalorder %v661, 1
        %vm672 = vcmp.eq.s32.totalorder %v662, 1
        %vm673 = vcmp.eq.s32.totalorder %v663, 1
        %vm674 = vcmp.eq.s32.totalorder %v664, 1
        %vm675 = vcmp.eq.s32.totalorder %v665, 1
        %vm676 = vcmp.eq.s32.totalorder %v666, 1
        %vm677 = vcmp.eq.s32.totalorder %v667, 1
        %vm678 = vcmp.eq.s32.totalorder %v668, 1
        %vm679 = vcmp.eq.s32.totalorder %v669, 1
        %v680 = vsel %vm670, %v599, 0.0
        %v681 = vsel %vm670, %v600, 0.0
        %v682 = vsel %vm671, %v601, 0.0
        %v683 = vsel %vm671, %v602, 0.0
        %v684 = vsel %vm672, %v603, 0.0
        %v685 = vsel %vm672, %v604, 0.0
        %v686 = vsel %vm673, %v605, 0.0
        %v687 = vsel %vm673, %v606, 0.0
        %v688 = vsel %vm674, %v607, 0.0
        %v689 = vsel %vm674, %v608, 0.0
        %v690 = vsel %vm675, %v609, 0.0
        %v691 = vsel %vm675, %v610, 0.0
        %v692 = vsel %vm676, %v611, 0.0
        %v693 = vsel %vm676, %v612, 0.0
        %v694 = vsel %vm677, %v613, 0.0
        %v695 = vsel %vm677, %v614, 0.0
        %v696 = vsel %vm678, %v615, 0.0
        %v697 = vsel %vm678, %v616, 0.0
        %v698 = vsel %vm679, %v617, 0.0
        %v699 = vsel %vm679, %v618, 0.0
        %vm700 = vcmask 261120
        %701 = vst.msk [vmem:[#allocation2 + $0x1] sm:$0xff] %vm700, %v680
        %702 = vst.msk [vmem:[#allocation2 + $0x9] sm:$0xff] %vm700, %v681
        %703 = vst.msk [vmem:[#allocation2 + $0x19] sm:$0xff] %vm700, %v682
        %704 = vst.msk [vmem:[#allocation2 + $0x21] sm:$0xff] %vm700, %v683
        %705 = vst.msk [vmem:[#allocation2 + $0x31] sm:$0xff] %vm700, %v684
        %706 = vst.msk [vmem:[#allocation2 + $0x39] sm:$0xff] %vm700, %v685
        %707 = vst.msk [vmem:[#allocation2 + $0x49] sm:$0xff] %vm700, %v686
        %708 = vst.msk [vmem:[#allocation2 + $0x51] sm:$0xff] %vm700, %v687
        %709 = vst.msk [vmem:[#allocation2 + $0x61] sm:$0xff] %vm700, %v688
        %710 = vst.msk [vmem:[#allocation2 + $0x69] sm:$0xff] %vm700, %v689
        %711 = vst.msk [vmem:[#allocation2 + $0x79] sm:$0xff] %vm700, %v690
        %712 = vst.msk [vmem:[#allocation2 + $0x81] sm:$0xff] %vm700, %v691
        %713 = vst.msk [vmem:[#allocation2 + $0x91] sm:$0xff] %vm700, %v692
        %714 = vst.msk [vmem:[#allocation2 + $0x99] sm:$0xff] %vm700, %v693
        %715 = vst.msk [vmem:[#allocation2 + $0xa9] sm:$0xff] %vm700, %v694
        %716 = vst.msk [vmem:[#allocation2 + $0xb1] sm:$0xff] %vm700, %v695
        %717 = vst.msk [vmem:[#allocation2 + $0xc1] sm:$0xff] %vm700, %v696
        %718 = vst.msk [vmem:[#allocation2 + $0xc9] sm:$0xff] %vm700, %v697
        %719 = vst.msk [vmem:[#allocation2 + $0xd9] sm:$0xff] %vm700, %v698
        %720 = vst.msk [vmem:[#allocation2 + $0xe1] sm:$0xff] %vm700, %v699
        %vm721 = vcmask 253952
        %722 = vst.msk [vmem:[#allocation2] sm:$0x1] %vm721, 0.0
        %723 = vst.msk [vmem:[#allocation2 + $0x18] sm:$0x1] %vm721, 0.0
        %724 = vst.msk [vmem:[#allocation2 + $0x30] sm:$0x1] %vm721, 0.0
        %725 = vst.msk [vmem:[#allocation2 + $0x48] sm:$0x1] %vm721, 0.0
        %726 = vst.msk [vmem:[#allocation2 + $0x60] sm:$0x1] %vm721, 0.0
        %727 = vst.msk [vmem:[#allocation2 + $0x78] sm:$0x1] %vm721, 0.0
        %728 = vst.msk [vmem:[#allocation2 + $0x90] sm:$0x1] %vm721, 0.0
        %729 = vst.msk [vmem:[#allocation2 + $0xa8] sm:$0x1] %vm721, 0.0
        %730 = vst.msk [vmem:[#allocation2 + $0xc0] sm:$0x1] %vm721, 0.0
        %731 = vst.msk [vmem:[#allocation2 + $0xd8] sm:$0x1] %vm721, 0.0
        %732 = vst.msk [vmem:[#allocation2 + $0x11] sm:$0x1] %vm721, 0.0
        %733 = vst.msk [vmem:[#allocation2 + $0x29] sm:$0x1] %vm721, 0.0
        %734 = vst.msk [vmem:[#allocation2 + $0x41] sm:$0x1] %vm721, 0.0
        %735 = vst.msk [vmem:[#allocation2 + $0x59] sm:$0x1] %vm721, 0.0
        %736 = vst.msk [vmem:[#allocation2 + $0x71] sm:$0x1] %vm721, 0.0
        %737 = vst.msk [vmem:[#allocation2 + $0x89] sm:$0x1] %vm721, 0.0
        %738 = vst.msk [vmem:[#allocation2 + $0xa1] sm:$0x1] %vm721, 0.0
        %739 = vst.msk [vmem:[#allocation2 + $0xb9] sm:$0x1] %vm721, 0.0
        %740 = vst.msk [vmem:[#allocation2 + $0xd1] sm:$0x1] %vm721, 0.0
        %741 = vst.msk [vmem:[#allocation2 + $0xe9] sm:$0x1] %vm721, 0.0
        %v742 = vld [vmem:[#allocation2] sm:$0xff]
        %v743 = vld [vmem:[#allocation2 + $0x8] sm:$0xff]
        %v744 = vld [vmem:[#allocation2 + $0x18] sm:$0xff]
        %v745 = vld [vmem:[#allocation2 + $0x20] sm:$0xff]
        %v746 = vld [vmem:[#allocation2 + $0x30] sm:$0xff]
        %v747 = vld [vmem:[#allocation2 + $0x38] sm:$0xff]
        %v748 = vld [vmem:[#allocation2 + $0x48] sm:$0xff]
        %v749 = vld [vmem:[#allocation2 + $0x50] sm:$0xff]
        %v750 = vld [vmem:[#allocation2 + $0x60] sm:$0xff]
        %v751 = vld [vmem:[#allocation2 + $0x68] sm:$0xff]
        %v752 = vld [vmem:[#allocation2 + $0x78] sm:$0xff]
        %v753 = vld [vmem:[#allocation2 + $0x80] sm:$0xff]
        %v754 = vld [vmem:[#allocation2 + $0x90] sm:$0xff]
        %v755 = vld [vmem:[#allocation2 + $0x98] sm:$0xff]
        %v756 = vld [vmem:[#allocation2 + $0xa8] sm:$0xff]
        %v757 = vld [vmem:[#allocation2 + $0xb0] sm:$0xff]
        %v758 = vld [vmem:[%s5] sm:$0xff]
        %v759 = vld [vmem:[%s5 + $0x8] sm:$0xff]
        %v760 = vld [vmem:[%s5 + $0x10] sm:$0xff]
        %v761 = vld [vmem:[%s5 + $0x18] sm:$0xff]
        %v762 = vld [vmem:[#allocation2 + $0x1] sm:$0xff]
        %v763 = vld [vmem:[#allocation2 + $0x9] sm:$0xff]
        %v764 = vld [vmem:[#allocation2 + $0x19] sm:$0xff]
        %v765 = vld [vmem:[#allocation2 + $0x21] sm:$0xff]
        %v766 = vld [vmem:[#allocation2 + $0x31] sm:$0xff]
        %v767 = vld [vmem:[#allocation2 + $0x39] sm:$0xff]
        %v768 = vld [vmem:[#allocation2 + $0x49] sm:$0xff]
        %v769 = vld [vmem:[#allocation2 + $0x51] sm:$0xff]
        %v770 = vld [vmem:[#allocation2 + $0x61] sm:$0xff]
        %v771 = vld [vmem:[#allocation2 + $0x69] sm:$0xff]
        %v772 = vld [vmem:[#allocation2 + $0x79] sm:$0xff]
        %v773 = vld [vmem:[#allocation2 + $0x81] sm:$0xff]
        %v774 = vld [vmem:[#allocation2 + $0x91] sm:$0xff]
        %v775 = vld [vmem:[#allocation2 + $0x99] sm:$0xff]
        %v776 = vld [vmem:[#allocation2 + $0xa9] sm:$0xff]
        %v777 = vld [vmem:[#allocation2 + $0xb1] sm:$0xff]
        %v778 = vld [vmem:[%s5 + $0x20] sm:$0xff]
        %v779 = vld [vmem:[%s5 + $0x28] sm:$0xff]
        %v780 = vld [vmem:[%s5 + $0x30] sm:$0xff]
        %v781 = vld [vmem:[%s5 + $0x38] sm:$0xff]
        %v783 = vsel %vm700, %v762, 0
        %v786 = vsel %vm700, %v763, 0
        %v789 = vsel %vm700, %v764, 0
        %v792 = vsel %vm700, %v765, 0
        %v795 = vsel %vm700, %v766, 0
        %v798 = vsel %vm700, %v767, 0
        %v801 = vsel %vm700, %v768, 0
        %v804 = vsel %vm700, %v769, 0
        %v807 = vsel %vm700, %v770, 0
        %v810 = vsel %vm700, %v771, 0
        %v813 = vsel %vm700, %v772, 0
        %v816 = vsel %vm700, %v773, 0
        %v819 = vsel %vm700, %v774, 0
        %v822 = vsel %vm700, %v775, 0
        %v825 = vsel %vm700, %v776, 0
        %v828 = vsel %vm700, %v777, 0
        %830 = vmatprep.subr.mxu0 0.0
        %831 = vmatpush1.msra.mxu0 0.0
        %832 = vmatprep.subr.mxu0 0.0
        %833 = vmatpush1.msra.mxu0 0.0
        %834 = vmatprep.subr.mxu0 0.0
        %835 = vmatpush1.msra.mxu0 0.0
        %836 = vmatprep.subr.mxu0 0.0
        %837 = vmatpush1.msra.mxu0 0.0
        %838 = vmatprep.subr.mxu0 0.0
        %839 = vmatpush1.msra.mxu0 0.0
        %840 = vmatprep.subr.mxu0 0.0
        %841 = vmatpush1.msra.mxu0 0.0
        %842 = vmatprep.subr.mxu0 0.0
        %843 = vmatpush1.msra.mxu0 0.0
        %844 = vmatprep.subr.mxu0 0.0
        %845 = vmatpush1.msra.mxu0 0.0
        %846 = vmatprep.subr.mxu0 0.0
        %847 = vmatpush1.msra.mxu0 0.0
        %848 = vmatprep.subr.mxu0 0.0
        %849 = vmatpush1.msra.mxu0 0.0
        %850 = vmatprep.subr.mxu0 0.0
        %851 = vmatpush1.msra.mxu0 0.0
        %852 = vmatprep.subr.mxu0 0.0
        %853 = vmatpush1.msra.mxu0 0.0
        %854 = vmatprep.subr.mxu0 0.0
        %855 = vmatpush1.msra.mxu0 %v781
        %856 = vmatprep.subr.mxu0 0.0
        %857 = vmatpush1.msra.mxu0 %v780
        %858 = vmatprep.subr.mxu0 0.0
        %859 = vmatpush1.msra.mxu0 %v779
        %860 = vmatprep.subr.mxu0 0.0
        %861 = vmatpush1.msra.mxu0 %v778
        %862 = vmatprep.subr.mxu0 0.0
        %863 = vmatpush2.msra.mxu0 0.0
        %864 = vmatprep.subr.mxu0 0.0
        %865 = vmatpush2.msra.mxu0 0.0
        %866 = vmatprep.subr.mxu0 0.0
        %867 = vmatpush2.msra.mxu0 0.0
        %868 = vmatprep.subr.mxu0 0.0
        %869 = vmatpush2.msra.mxu0 0.0
        %870 = vmatprep.subr.mxu0 0.0
        %871 = vmatpush2.msra.mxu0 0.0
        %872 = vmatprep.subr.mxu0 0.0
        %873 = vmatpush2.msra.mxu0 0.0
        %874 = vmatprep.subr.mxu0 0.0
        %875 = vmatpush2.msra.mxu0 0.0
        %876 = vmatprep.subr.mxu0 0.0
        %877 = vmatpush2.msra.mxu0 0.0
        %878 = vmatprep.subr.mxu0 0.0
        %879 = vmatpush2.msra.mxu0 0.0
        %880 = vmatprep.subr.mxu0 0.0
        %881 = vmatpush2.msra.mxu0 0.0
        %882 = vmatprep.subr.mxu0 0.0
        %883 = vmatpush2.msra.mxu0 0.0
        %884 = vmatprep.subr.mxu0 0.0
        %885 = vmatpush2.msra.mxu0 0.0
        %886 = vmatprep.subr.mxu0 0.0
        %887 = vmatpush2.msra.mxu0 0.0
        %888 = vmatprep.subr.mxu0 0.0
        %889 = vmatpush2.msra.mxu0 0.0
        %890 = vmatprep.subr.mxu0 0.0
        %891 = vmatpush2.msra.mxu0 0.0
        %892 = vmatprep.subr.mxu0 0.0
        %893 = vmatpush2.msra.mxu0 0.0
        %894 = vmatprep.mubr.f32.mxu0 0.0
        %895 = vmatmul.mubr.f32.gmra.mxu0 %v783
        %v896 = vpop.f32.mrf.mxu0
        %v897 = vadd.f32 0.0, %v896
        %v898 = vpop.f32.mrf.mxu0
        %899 = vmatprep.mubr.f32.mxu0 0.0
        %900 = vmatmul.mubr.f32.gmra.mxu0 %v786
        %v901 = vpop.f32.mrf.mxu0
        %v902 = vadd.f32 0.0, %v901
        %v903 = vpop.f32.mrf.mxu0
        %904 = vmatprep.mubr.f32.mxu0 0.0
        %905 = vmatmul.mubr.f32.gmra.mxu0 %v789
        %v906 = vpop.f32.mrf.mxu0
        %v907 = vadd.f32 0.0, %v906
        %v908 = vpop.f32.mrf.mxu0
        %909 = vmatprep.mubr.f32.mxu0 0.0
        %910 = vmatmul.mubr.f32.gmra.mxu0 %v792
        %v911 = vpop.f32.mrf.mxu0
        %v912 = vadd.f32 0.0, %v911
        %v913 = vpop.f32.mrf.mxu0
        %914 = vmatprep.mubr.f32.mxu0 0.0
        %915 = vmatmul.mubr.f32.gmra.mxu0 %v795
        %v916 = vpop.f32.mrf.mxu0
        %v917 = vadd.f32 0.0, %v916
        %v918 = vpop.f32.mrf.mxu0
        %919 = vmatprep.mubr.f32.mxu0 0.0
        %920 = vmatmul.mubr.f32.gmra.mxu0 %v798
        %v921 = vpop.f32.mrf.mxu0
        %v922 = vadd.f32 0.0, %v921
        %v923 = vpop.f32.mrf.mxu0
        %924 = vmatprep.mubr.f32.mxu0 0.0
        %925 = vmatmul.mubr.f32.gmra.mxu0 %v801
        %v926 = vpop.f32.mrf.mxu0
        %v927 = vadd.f32 0.0, %v926
        %v928 = vpop.f32.mrf.mxu0
        %929 = vmatprep.mubr.f32.mxu0 0.0
        %930 = vmatmul.mubr.f32.gmra.mxu0 %v804
        %v931 = vpop.f32.mrf.mxu0
        %v932 = vadd.f32 0.0, %v931
        %v933 = vpop.f32.mrf.mxu0
        %934 = vmatprep.mubr.f32.mxu0 0.0
        %935 = vmatmul.mubr.f32.gmra.mxu0 %v807
        %v936 = vpop.f32.mrf.mxu0
        %v937 = vadd.f32 0.0, %v936
        %v938 = vpop.f32.mrf.mxu0
        %939 = vmatprep.mubr.f32.mxu0 0.0
        %940 = vmatmul.mubr.f32.gmra.mxu0 %v810
        %v941 = vpop.f32.mrf.mxu0
        %v942 = vadd.f32 0.0, %v941
        %v943 = vpop.f32.mrf.mxu0
        %944 = vmatprep.mubr.f32.mxu0 0.0
        %945 = vmatmul.mubr.f32.gmra.mxu0 %v813
        %v946 = vpop.f32.mrf.mxu0
        %v947 = vadd.f32 0.0, %v946
        %v948 = vpop.f32.mrf.mxu0
        %949 = vmatprep.mubr.f32.mxu0 0.0
        %950 = vmatmul.mubr.f32.gmra.mxu0 %v816
        %v951 = vpop.f32.mrf.mxu0
        %v952 = vadd.f32 0.0, %v951
        %v953 = vpop.f32.mrf.mxu0
        %954 = vmatprep.mubr.f32.mxu0 0.0
        %955 = vmatmul.mubr.f32.gmra.mxu0 %v819
        %v956 = vpop.f32.mrf.mxu0
        %v957 = vadd.f32 0.0, %v956
        %v958 = vpop.f32.mrf.mxu0
        %959 = vmatprep.mubr.f32.mxu0 0.0
        %960 = vmatmul.mubr.f32.gmra.mxu0 %v822
        %v961 = vpop.f32.mrf.mxu0
        %v962 = vadd.f32 0.0, %v961
        %v963 = vpop.f32.mrf.mxu0
        %964 = vmatprep.mubr.f32.mxu0 0.0
        %965 = vmatmul.mubr.f32.gmra.mxu0 %v825
        %v966 = vpop.f32.mrf.mxu0
        %v967 = vadd.f32 0.0, %v966
        %v968 = vpop.f32.mrf.mxu0
        %969 = vmatprep.mubr.f32.mxu0 0.0
        %970 = vmatmul.mubr.f32.gmra.mxu0 %v828
        %v971 = vpop.f32.mrf.mxu0
        %v972 = vadd.f32 0.0, %v971
        %v973 = vpop.f32.mrf.mxu0
        %974 = vdwg.mxu0
        %v976 = vsel %vm700, %v742, 0
        %v979 = vsel %vm700, %v743, 0
        %v982 = vsel %vm700, %v744, 0
        %v985 = vsel %vm700, %v745, 0
        %v988 = vsel %vm700, %v746, 0
        %v991 = vsel %vm700, %v747, 0
        %v994 = vsel %vm700, %v748, 0
        %v997 = vsel %vm700, %v749, 0
        %v1000 = vsel %vm700, %v750, 0
        %v1003 = vsel %vm700, %v751, 0
        %v1006 = vsel %vm700, %v752, 0
        %v1009 = vsel %vm700, %v753, 0
        %v1012 = vsel %vm700, %v754, 0
        %v1015 = vsel %vm700, %v755, 0
        %v1018 = vsel %vm700, %v756, 0
        %v1021 = vsel %vm700, %v757, 0
        %1023 = vmatprep.subr.mxu0 0.0
        %1024 = vmatpush1.msra.mxu0 0.0
        %1025 = vmatprep.subr.mxu0 0.0
        %1026 = vmatpush1.msra.mxu0 0.0
        %1027 = vmatprep.subr.mxu0 0.0
        %1028 = vmatpush1.msra.mxu0 0.0
        %1029 = vmatprep.subr.mxu0 0.0
        %1030 = vmatpush1.msra.mxu0 0.0
        %1031 = vmatprep.subr.mxu0 0.0
        %1032 = vmatpush1.msra.mxu0 0.0
        %1033 = vmatprep.subr.mxu0 0.0
        %1034 = vmatpush1.msra.mxu0 0.0
        %1035 = vmatprep.subr.mxu0 0.0
        %1036 = vmatpush1.msra.mxu0 0.0
        %1037 = vmatprep.subr.mxu0 0.0
        %1038 = vmatpush1.msra.mxu0 0.0
        %1039 = vmatprep.subr.mxu0 0.0
        %1040 = vmatpush1.msra.mxu0 0.0
        %1041 = vmatprep.subr.mxu0 0.0
        %1042 = vmatpush1.msra.mxu0 0.0
        %1043 = vmatprep.subr.mxu0 0.0
        %1044 = vmatpush1.msra.mxu0 0.0
        %1045 = vmatprep.subr.mxu0 0.0
        %1046 = vmatpush1.msra.mxu0 0.0
        %1047 = vmatprep.subr.mxu0 0.0
        %1048 = vmatpush1.msra.mxu0 %v761
        %1049 = vmatprep.subr.mxu0 0.0
        %1050 = vmatpush1.msra.mxu0 %v760
        %1051 = vmatprep.subr.mxu0 0.0
        %1052 = vmatpush1.msra.mxu0 %v759
        %1053 = vmatprep.subr.mxu0 0.0
        %1054 = vmatpush1.msra.mxu0 %v758
        %1055 = vmatprep.subr.mxu0 0.0
        %1056 = vmatpush2.msra.mxu0 0.0
        %1057 = vmatprep.subr.mxu0 0.0
        %1058 = vmatpush2.msra.mxu0 0.0
        %1059 = vmatprep.subr.mxu0 0.0
        %1060 = vmatpush2.msra.mxu0 0.0
        %1061 = vmatprep.subr.mxu0 0.0
        %1062 = vmatpush2.msra.mxu0 0.0
        %1063 = vmatprep.subr.mxu0 0.0
        %1064 = vmatpush2.msra.mxu0 0.0
        %1065 = vmatprep.subr.mxu0 0.0
        %1066 = vmatpush2.msra.mxu0 0.0
        %1067 = vmatprep.subr.mxu0 0.0
        %1068 = vmatpush2.msra.mxu0 0.0
        %1069 = vmatprep.subr.mxu0 0.0
        %1070 = vmatpush2.msra.mxu0 0.0
        %1071 = vmatprep.subr.mxu0 0.0
        %1072 = vmatpush2.msra.mxu0 0.0
        %1073 = vmatprep.subr.mxu0 0.0
        %1074 = vmatpush2.msra.mxu0 0.0
        %1075 = vmatprep.subr.mxu0 0.0
        %1076 = vmatpush2.msra.mxu0 0.0
        %1077 = vmatprep.subr.mxu0 0.0
        %1078 = vmatpush2.msra.mxu0 0.0
        %1079 = vmatprep.subr.mxu0 0.0
        %1080 = vmatpush2.msra.mxu0 0.0
        %1081 = vmatprep.subr.mxu0 0.0
        %1082 = vmatpush2.msra.mxu0 0.0
        %1083 = vmatprep.subr.mxu0 0.0
        %1084 = vmatpush2.msra.mxu0 0.0
        %1085 = vmatprep.subr.mxu0 0.0
        %1086 = vmatpush2.msra.mxu0 0.0
        %1087 = vmatprep.mubr.f32.mxu0 0.0
        %1088 = vmatmul.mubr.f32.gmra.mxu0 %v976
        %v1089 = vpop.f32.mrf.mxu0
        %v1090 = vadd.f32 %v897, %v1089
        %v1091 = vpop.f32.mrf.mxu0
        %1092 = vmatprep.mubr.f32.mxu0 0.0
        %1093 = vmatmul.mubr.f32.gmra.mxu0 %v979
        %v1094 = vpop.f32.mrf.mxu0
        %v1095 = vadd.f32 %v902, %v1094
        %v1096 = vpop.f32.mrf.mxu0
        %1097 = vmatprep.mubr.f32.mxu0 0.0
        %1098 = vmatmul.mubr.f32.gmra.mxu0 %v982
        %v1099 = vpop.f32.mrf.mxu0
        %v1100 = vadd.f32 %v907, %v1099
        %v1101 = vpop.f32.mrf.mxu0
        %1102 = vmatprep.mubr.f32.mxu0 0.0
        %1103 = vmatmul.mubr.f32.gmra.mxu0 %v985
        %v1104 = vpop.f32.mrf.mxu0
        %v1105 = vadd.f32 %v912, %v1104
        %v1106 = vpop.f32.mrf.mxu0
        %1107 = vmatprep.mubr.f32.mxu0 0.0
        %1108 = vmatmul.mubr.f32.gmra.mxu0 %v988
        %v1109 = vpop.f32.mrf.mxu0
        %v1110 = vadd.f32 %v917, %v1109
        %v1111 = vpop.f32.mrf.mxu0
        %1112 = vmatprep.mubr.f32.mxu0 0.0
        %1113 = vmatmul.mubr.f32.gmra.mxu0 %v991
        %v1114 = vpop.f32.mrf.mxu0
        %v1115 = vadd.f32 %v922, %v1114
        %v1116 = vpop.f32.mrf.mxu0
        %1117 = vmatprep.mubr.f32.mxu0 0.0
        %1118 = vmatmul.mubr.f32.gmra.mxu0 %v994
        %v1119 = vpop.f32.mrf.mxu0
        %v1120 = vadd.f32 %v927, %v1119
        %v1121 = vpop.f32.mrf.mxu0
        %1122 = vmatprep.mubr.f32.mxu0 0.0
        %1123 = vmatmul.mubr.f32.gmra.mxu0 %v997
        %v1124 = vpop.f32.mrf.mxu0
        %v1125 = vadd.f32 %v932, %v1124
        %v1126 = vpop.f32.mrf.mxu0
        %1127 = vmatprep.mubr.f32.mxu0 0.0
        %1128 = vmatmul.mubr.f32.gmra.mxu0 %v1000
        %v1129 = vpop.f32.mrf.mxu0
        %v1130 = vadd.f32 %v937, %v1129
        %v1131 = vpop.f32.mrf.mxu0
        %1132 = vmatprep.mubr.f32.mxu0 0.0
        %1133 = vmatmul.mubr.f32.gmra.mxu0 %v1003
        %v1134 = vpop.f32.mrf.mxu0
        %v1135 = vadd.f32 %v942, %v1134
        %v1136 = vpop.f32.mrf.mxu0
        %1137 = vmatprep.mubr.f32.mxu0 0.0
        %1138 = vmatmul.mubr.f32.gmra.mxu0 %v1006
        %v1139 = vpop.f32.mrf.mxu0
        %v1140 = vadd.f32 %v947, %v1139
        %v1141 = vpop.f32.mrf.mxu0
        %1142 = vmatprep.mubr.f32.mxu0 0.0
        %1143 = vmatmul.mubr.f32.gmra.mxu0 %v1009
        %v1144 = vpop.f32.mrf.mxu0
        %v1145 = vadd.f32 %v952, %v1144
        %v1146 = vpop.f32.mrf.mxu0
        %1147 = vmatprep.mubr.f32.mxu0 0.0
        %1148 = vmatmul.mubr.f32.gmra.mxu0 %v1012
        %v1149 = vpop.f32.mrf.mxu0
        %v1150 = vadd.f32 %v957, %v1149
        %v1151 = vpop.f32.mrf.mxu0
        %1152 = vmatprep.mubr.f32.mxu0 0.0
        %1153 = vmatmul.mubr.f32.gmra.mxu0 %v1015
        %v1154 = vpop.f32.mrf.mxu0
        %v1155 = vadd.f32 %v962, %v1154
        %v1156 = vpop.f32.mrf.mxu0
        %1157 = vmatprep.mubr.f32.mxu0 0.0
        %1158 = vmatmul.mubr.f32.gmra.mxu0 %v1018
        %v1159 = vpop.f32.mrf.mxu0
        %v1160 = vadd.f32 %v967, %v1159
        %v1161 = vpop.f32.mrf.mxu0
        %1162 = vmatprep.mubr.f32.mxu0 0.0
        %1163 = vmatmul.mubr.f32.gmra.mxu0 %v1021
        %v1164 = vpop.f32.mrf.mxu0
        %v1165 = vadd.f32 %v972, %v1164
        %v1166 = vpop.f32.mrf.mxu0
        %1167 = vdwg.mxu0
        %v1168 = vld [vmem:[#allocation2 + $0x2] sm:$0xff]
        %v1169 = vld [vmem:[#allocation2 + $0xa] sm:$0xff]
        %v1170 = vld [vmem:[#allocation2 + $0x1a] sm:$0xff]
        %v1171 = vld [vmem:[#allocation2 + $0x22] sm:$0xff]
        %v1172 = vld [vmem:[#allocation2 + $0x32] sm:$0xff]
        %v1173 = vld [vmem:[#allocation2 + $0x3a] sm:$0xff]
        %v1174 = vld [vmem:[#allocation2 + $0x4a] sm:$0xff]
        %v1175 = vld [vmem:[#allocation2 + $0x52] sm:$0xff]
        %v1176 = vld [vmem:[#allocation2 + $0x62] sm:$0xff]
        %v1177 = vld [vmem:[#allocation2 + $0x6a] sm:$0xff]
        %v1178 = vld [vmem:[#allocation2 + $0x7a] sm:$0xff]
        %v1179 = vld [vmem:[#allocation2 + $0x82] sm:$0xff]
        %v1180 = vld [vmem:[#allocation2 + $0x92] sm:$0xff]
        %v1181 = vld [vmem:[#allocation2 + $0x9a] sm:$0xff]
        %v1182 = vld [vmem:[#allocation2 + $0xaa] sm:$0xff]
        %v1183 = vld [vmem:[#allocation2 + $0xb2] sm:$0xff]
        %v1184 = vld [vmem:[%s5 + $0x40] sm:$0xff]
        %v1185 = vld [vmem:[%s5 + $0x48] sm:$0xff]
        %v1186 = vld [vmem:[%s5 + $0x50] sm:$0xff]
        %v1187 = vld [vmem:[%s5 + $0x58] sm:$0xff]
        %v1189 = vsel %vm700, %v1168, 0
        %v1192 = vsel %vm700, %v1169, 0
        %v1195 = vsel %vm700, %v1170, 0
        %v1198 = vsel %vm700, %v1171, 0
        %v1201 = vsel %vm700, %v1172, 0
        %v1204 = vsel %vm700, %v1173, 0
        %v1207 = vsel %vm700, %v1174, 0
        %v1210 = vsel %vm700, %v1175, 0
        %v1213 = vsel %vm700, %v1176, 0
        %v1216 = vsel %vm700, %v1177, 0
        %v1219 = vsel %vm700, %v1178, 0
        %v1222 = vsel %vm700, %v1179, 0
        %v1225 = vsel %vm700, %v1180, 0
        %v1228 = vsel %vm700, %v1181, 0
        %v1231 = vsel %vm700, %v1182, 0
        %v1234 = vsel %vm700, %v1183, 0
        %1236 = vmatprep.subr.mxu0 0.0
        %1237 = vmatpush1.msra.mxu0 0.0
        %1238 = vmatprep.subr.mxu0 0.0
        %1239 = vmatpush1.msra.mxu0 0.0
        %1240 = vmatprep.subr.mxu0 0.0
        %1241 = vmatpush1.msra.mxu0 0.0
        %1242 = vmatprep.subr.mxu0 0.0
        %1243 = vmatpush1.msra.mxu0 0.0
        %1244 = vmatprep.subr.mxu0 0.0
        %1245 = vmatpush1.msra.mxu0 0.0
        %1246 = vmatprep.subr.mxu0 0.0
        %1247 = vmatpush1.msra.mxu0 0.0
        %1248 = vmatprep.subr.mxu0 0.0
        %1249 = vmatpush1.msra.mxu0 0.0
        %1250 = vmatprep.subr.mxu0 0.0
        %1251 = vmatpush1.msra.mxu0 0.0
        %1252 = vmatprep.subr.mxu0 0.0
        %1253 = vmatpush1.msra.mxu0 0.0
        %1254 = vmatprep.subr.mxu0 0.0
        %1255 = vmatpush1.msra.mxu0 0.0
        %1256 = vmatprep.subr.mxu0 0.0
        %1257 = vmatpush1.msra.mxu0 0.0
        %1258 = vmatprep.subr.mxu0 0.0
        %1259 = vmatpush1.msra.mxu0 0.0
        %1260 = vmatprep.subr.mxu0 0.0
        %1261 = vmatpush1.msra.mxu0 %v1187
        %1262 = vmatprep.subr.mxu0 0.0
        %1263 = vmatpush1.msra.mxu0 %v1186
        %1264 = vmatprep.subr.mxu0 0.0
        %1265 = vmatpush1.msra.mxu0 %v1185
        %1266 = vmatprep.subr.mxu0 0.0
        %1267 = vmatpush1.msra.mxu0 %v1184
        %1268 = vmatprep.subr.mxu0 0.0
        %1269 = vmatpush2.msra.mxu0 0.0
        %1270 = vmatprep.subr.mxu0 0.0
        %1271 = vmatpush2.msra.mxu0 0.0
        %1272 = vmatprep.subr.mxu0 0.0
        %1273 = vmatpush2.msra.mxu0 0.0
        %1274 = vmatprep.subr.mxu0 0.0
        %1275 = vmatpush2.msra.mxu0 0.0
        %1276 = vmatprep.subr.mxu0 0.0
        %1277 = vmatpush2.msra.mxu0 0.0
        %1278 = vmatprep.subr.mxu0 0.0
        %1279 = vmatpush2.msra.mxu0 0.0
        %1280 = vmatprep.subr.mxu0 0.0
        %1281 = vmatpush2.msra.mxu0 0.0
        %1282 = vmatprep.subr.mxu0 0.0
        %1283 = vmatpush2.msra.mxu0 0.0
        %1284 = vmatprep.subr.mxu0 0.0
        %1285 = vmatpush2.msra.mxu0 0.0
        %1286 = vmatprep.subr.mxu0 0.0
        %1287 = vmatpush2.msra.mxu0 0.0
        %1288 = vmatprep.subr.mxu0 0.0
        %1289 = vmatpush2.msra.mxu0 0.0
        %1290 = vmatprep.subr.mxu0 0.0
        %1291 = vmatpush2.msra.mxu0 0.0
        %1292 = vmatprep.subr.mxu0 0.0
        %1293 = vmatpush2.msra.mxu0 0.0
        %1294 = vmatprep.subr.mxu0 0.0
        %1295 = vmatpush2.msra.mxu0 0.0
        %1296 = vmatprep.subr.mxu0 0.0
        %1297 = vmatpush2.msra.mxu0 0.0
        %1298 = vmatprep.subr.mxu0 0.0
        %1299 = vmatpush2.msra.mxu0 0.0
        %1300 = vmatprep.mubr.f32.mxu0 0.0
        %1301 = vmatmul.mubr.f32.gmra.mxu0 %v1189
        %v1302 = vpop.f32.mrf.mxu0
        %v1303 = vadd.f32 0.0, %v1302
        %v1304 = vpop.f32.mrf.mxu0
        %1305 = vmatprep.mubr.f32.mxu0 0.0
        %1306 = vmatmul.mubr.f32.gmra.mxu0 %v1192
        %v1307 = vpop.f32.mrf.mxu0
        %v1308 = vadd.f32 0.0, %v1307
        %v1309 = vpop.f32.mrf.mxu0
        %1310 = vmatprep.mubr.f32.mxu0 0.0
        %1311 = vmatmul.mubr.f32.gmra.mxu0 %v1195
        %v1312 = vpop.f32.mrf.mxu0
        %v1313 = vadd.f32 0.0, %v1312
        %v1314 = vpop.f32.mrf.mxu0
        %1315 = vmatprep.mubr.f32.mxu0 0.0
        %1316 = vmatmul.mubr.f32.gmra.mxu0 %v1198
        %v1317 = vpop.f32.mrf.mxu0
        %v1318 = vadd.f32 0.0, %v1317
        %v1319 = vpop.f32.mrf.mxu0
        %1320 = vmatprep.mubr.f32.mxu0 0.0
        %1321 = vmatmul.mubr.f32.gmra.mxu0 %v1201
        %v1322 = vpop.f32.mrf.mxu0
        %v1323 = vadd.f32 0.0, %v1322
        %v1324 = vpop.f32.mrf.mxu0
        %1325 = vmatprep.mubr.f32.mxu0 0.0
        %1326 = vmatmul.mubr.f32.gmra.mxu0 %v1204
        %v1327 = vpop.f32.mrf.mxu0
        %v1328 = vadd.f32 0.0, %v1327
        %v1329 = vpop.f32.mrf.mxu0
        %1330 = vmatprep.mubr.f32.mxu0 0.0
        %1331 = vmatmul.mubr.f32.gmra.mxu0 %v1207
        %v1332 = vpop.f32.mrf.mxu0
        %v1333 = vadd.f32 0.0, %v1332
        %v1334 = vpop.f32.mrf.mxu0
        %1335 = vmatprep.mubr.f32.mxu0 0.0
        %1336 = vmatmul.mubr.f32.gmra.mxu0 %v1210
        %v1337 = vpop.f32.mrf.mxu0
        %v1338 = vadd.f32 0.0, %v1337
        %v1339 = vpop.f32.mrf.mxu0
        %1340 = vmatprep.mubr.f32.mxu0 0.0
        %1341 = vmatmul.mubr.f32.gmra.mxu0 %v1213
        %v1342 = vpop.f32.mrf.mxu0
        %v1343 = vadd.f32 0.0, %v1342
        %v1344 = vpop.f32.mrf.mxu0
        %1345 = vmatprep.mubr.f32.mxu0 0.0
        %1346 = vmatmul.mubr.f32.gmra.mxu0 %v1216
        %v1347 = vpop.f32.mrf.mxu0
        %v1348 = vadd.f32 0.0, %v1347
        %v1349 = vpop.f32.mrf.mxu0
        %1350 = vmatprep.mubr.f32.mxu0 0.0
        %1351 = vmatmul.mubr.f32.gmra.mxu0 %v1219
        %v1352 = vpop.f32.mrf.mxu0
        %v1353 = vadd.f32 0.0, %v1352
        %v1354 = vpop.f32.mrf.mxu0
        %1355 = vmatprep.mubr.f32.mxu0 0.0
        %1356 = vmatmul.mubr.f32.gmra.mxu0 %v1222
        %v1357 = vpop.f32.mrf.mxu0
        %v1358 = vadd.f32 0.0, %v1357
        %v1359 = vpop.f32.mrf.mxu0
        %1360 = vmatprep.mubr.f32.mxu0 0.0
        %1361 = vmatmul.mubr.f32.gmra.mxu0 %v1225
        %v1362 = vpop.f32.mrf.mxu0
        %v1363 = vadd.f32 0.0, %v1362
        %v1364 = vpop.f32.mrf.mxu0
        %1365 = vmatprep.mubr.f32.mxu0 0.0
        %1366 = vmatmul.mubr.f32.gmra.mxu0 %v1228
        %v1367 = vpop.f32.mrf.mxu0
        %v1368 = vadd.f32 0.0, %v1367
        %v1369 = vpop.f32.mrf.mxu0
        %1370 = vmatprep.mubr.f32.mxu0 0.0
        %1371 = vmatmul.mubr.f32.gmra.mxu0 %v1231
        %v1372 = vpop.f32.mrf.mxu0
        %v1373 = vadd.f32 0.0, %v1372
        %v1374 = vpop.f32.mrf.mxu0
        %1375 = vmatprep.mubr.f32.mxu0 0.0
        %1376 = vmatmul.mubr.f32.gmra.mxu0 %v1234
        %v1377 = vpop.f32.mrf.mxu0
        %v1378 = vadd.f32 0.0, %v1377
        %v1379 = vpop.f32.mrf.mxu0
        %1380 = vdwg.mxu0
        %v1381 = vadd.f32 %v1090, %v1303
        %v1382 = vadd.f32 %v1095, %v1308
        %v1383 = vadd.f32 %v1100, %v1313
        %v1384 = vadd.f32 %v1105, %v1318
        %v1385 = vadd.f32 %v1110, %v1323
        %v1386 = vadd.f32 %v1115, %v1328
        %v1387 = vadd.f32 %v1120, %v1333
        %v1388 = vadd.f32 %v1125, %v1338
        %v1389 = vadd.f32 %v1130, %v1343
        %v1390 = vadd.f32 %v1135, %v1348
        %v1391 = vadd.f32 %v1140, %v1353
        %v1392 = vadd.f32 %v1145, %v1358
        %v1393 = vadd.f32 %v1150, %v1363
        %v1394 = vadd.f32 %v1155, %v1368
        %v1395 = vadd.f32 %v1160, %v1373
        %v1396 = vadd.f32 %v1165, %v1378
        %s1397 = scalar_lea.vmem [#allocation2], 24
        %v1398 = vld [vmem:[%s1397] sm:$0xff]
        %v1399 = vld [vmem:[%s1397 + $0x8] sm:$0xff]
        %v1400 = vld [vmem:[%s1397 + $0x18] sm:$0xff]
        %v1401 = vld [vmem:[%s1397 + $0x20] sm:$0xff]
        %v1402 = vld [vmem:[%s1397 + $0x30] sm:$0xff]
        %v1403 = vld [vmem:[%s1397 + $0x38] sm:$0xff]
        %v1404 = vld [vmem:[%s1397 + $0x48] sm:$0xff]
        %v1405 = vld [vmem:[%s1397 + $0x50] sm:$0xff]
        %v1406 = vld [vmem:[%s1397 + $0x60] sm:$0xff]
        %v1407 = vld [vmem:[%s1397 + $0x68] sm:$0xff]
        %v1408 = vld [vmem:[%s1397 + $0x78] sm:$0xff]
        %v1409 = vld [vmem:[%s1397 + $0x80] sm:$0xff]
        %v1410 = vld [vmem:[%s1397 + $0x90] sm:$0xff]
        %v1411 = vld [vmem:[%s1397 + $0x98] sm:$0xff]
        %v1412 = vld [vmem:[%s1397 + $0xa8] sm:$0xff]
        %v1413 = vld [vmem:[%s1397 + $0xb0] sm:$0xff]
        %v1414 = vld [vmem:[%s5 + $0x60] sm:$0xff]
        %v1415 = vld [vmem:[%s5 + $0x68] sm:$0xff]
        %v1416 = vld [vmem:[%s5 + $0x70] sm:$0xff]
        %v1417 = vld [vmem:[%s5 + $0x78] sm:$0xff]
        %v1419 = vsel %vm700, %v1398, 0
        %v1422 = vsel %vm700, %v1399, 0
        %v1425 = vsel %vm700, %v1400, 0
        %v1428 = vsel %vm700, %v1401, 0
        %v1431 = vsel %vm700, %v1402, 0
        %v1434 = vsel %vm700, %v1403, 0
        %v1437 = vsel %vm700, %v1404, 0
        %v1440 = vsel %vm700, %v1405, 0
        %v1443 = vsel %vm700, %v1406, 0
        %v1446 = vsel %vm700, %v1407, 0
        %v1449 = vsel %vm700, %v1408, 0
        %v1452 = vsel %vm700, %v1409, 0
        %v1455 = vsel %vm700, %v1410, 0
        %v1458 = vsel %vm700, %v1411, 0
        %v1461 = vsel %vm700, %v1412, 0
        %v1464 = vsel %vm700, %v1413, 0
        %1466 = vmatprep.subr.mxu0 0.0
        %1467 = vmatpush1.msra.mxu0 0.0
        %1468 = vmatprep.subr.mxu0 0.0
        %1469 = vmatpush1.msra.mxu0 0.0
        %1470 = vmatprep.subr.mxu0 0.0
        %1471 = vmatpush1.msra.mxu0 0.0
        %1472 = vmatprep.subr.mxu0 0.0
        %1473 = vmatpush1.msra.mxu0 0.0
        %1474 = vmatprep.subr.mxu0 0.0
        %1475 = vmatpush1.msra.mxu0 0.0
        %1476 = vmatprep.subr.mxu0 0.0
        %1477 = vmatpush1.msra.mxu0 0.0
        %1478 = vmatprep.subr.mxu0 0.0
        %1479 = vmatpush1.msra.mxu0 0.0
        %1480 = vmatprep.subr.mxu0 0.0
        %1481 = vmatpush1.msra.mxu0 0.0
        %1482 = vmatprep.subr.mxu0 0.0
        %1483 = vmatpush1.msra.mxu0 0.0
        %1484 = vmatprep.subr.mxu0 0.0
        %1485 = vmatpush1.msra.mxu0 0.0
        %1486 = vmatprep.subr.mxu0 0.0
        %1487 = vmatpush1.msra.mxu0 0.0
        %1488 = vmatprep.subr.mxu0 0.0
        %1489 = vmatpush1.msra.mxu0 0.0
        %1490 = vmatprep.subr.mxu0 0.0
        %1491 = vmatpush1.msra.mxu0 %v1417
        %1492 = vmatprep.subr.mxu0 0.0
        %1493 = vmatpush1.msra.mxu0 %v1416
        %1494 = vmatprep.subr.mxu0 0.0
        %1495 = vmatpush1.msra.mxu0 %v1415
        %1496 = vmatprep.subr.mxu0 0.0
        %1497 = vmatpush1.msra.mxu0 %v1414
        %1498 = vmatprep.subr.mxu0 0.0
        %1499 = vmatpush2.msra.mxu0 0.0
        %1500 = vmatprep.subr.mxu0 0.0
        %1501 = vmatpush2.msra.mxu0 0.0
        %1502 = vmatprep.subr.mxu0 0.0
        %1503 = vmatpush2.msra.mxu0 0.0
        %1504 = vmatprep.subr.mxu0 0.0
        %1505 = vmatpush2.msra.mxu0 0.0
        %1506 = vmatprep.subr.mxu0 0.0
        %1507 = vmatpush2.msra.mxu0 0.0
        %1508 = vmatprep.subr.mxu0 0.0
        %1509 = vmatpush2.msra.mxu0 0.0
        %1510 = vmatprep.subr.mxu0 0.0
        %1511 = vmatpush2.msra.mxu0 0.0
        %1512 = vmatprep.subr.mxu0 0.0
        %1513 = vmatpush2.msra.mxu0 0.0
        %1514 = vmatprep.subr.mxu0 0.0
        %1515 = vmatpush2.msra.mxu0 0.0
        %1516 = vmatprep.subr.mxu0 0.0
        %1517 = vmatpush2.msra.mxu0 0.0
        %1518 = vmatprep.subr.mxu0 0.0
        %1519 = vmatpush2.msra.mxu0 0.0
        %1520 = vmatprep.subr.mxu0 0.0
        %1521 = vmatpush2.msra.mxu0 0.0
        %1522 = vmatprep.subr.mxu0 0.0
        %1523 = vmatpush2.msra.mxu0 0.0
        %1524 = vmatprep.subr.mxu0 0.0
        %1525 = vmatpush2.msra.mxu0 0.0
        %1526 = vmatprep.subr.mxu0 0.0
        %1527 = vmatpush2.msra.mxu0 0.0
        %1528 = vmatprep.subr.mxu0 0.0
        %1529 = vmatpush2.msra.mxu0 0.0
        %1530 = vmatprep.mubr.f32.mxu0 0.0
        %1531 = vmatmul.mubr.f32.gmra.mxu0 %v1419
        %v1532 = vpop.f32.mrf.mxu0
        %v1533 = vadd.f32 0.0, %v1532
        %v1534 = vpop.f32.mrf.mxu0
        %1535 = vmatprep.mubr.f32.mxu0 0.0
        %1536 = vmatmul.mubr.f32.gmra.mxu0 %v1422
        %v1537 = vpop.f32.mrf.mxu0
        %v1538 = vadd.f32 0.0, %v1537
        %v1539 = vpop.f32.mrf.mxu0
        %1540 = vmatprep.mubr.f32.mxu0 0.0
        %1541 = vmatmul.mubr.f32.gmra.mxu0 %v1425
        %v1542 = vpop.f32.mrf.mxu0
        %v1543 = vadd.f32 0.0, %v1542
        %v1544 = vpop.f32.mrf.mxu0
        %1545 = vmatprep.mubr.f32.mxu0 0.0
        %1546 = vmatmul.mubr.f32.gmra.mxu0 %v1428
        %v1547 = vpop.f32.mrf.mxu0
        %v1548 = vadd.f32 0.0, %v1547
        %v1549 = vpop.f32.mrf.mxu0
        %1550 = vmatprep.mubr.f32.mxu0 0.0
        %1551 = vmatmul.mubr.f32.gmra.mxu0 %v1431
        %v1552 = vpop.f32.mrf.mxu0
        %v1553 = vadd.f32 0.0, %v1552
        %v1554 = vpop.f32.mrf.mxu0
        %1555 = vmatprep.mubr.f32.mxu0 0.0
        %1556 = vmatmul.mubr.f32.gmra.mxu0 %v1434
        %v1557 = vpop.f32.mrf.mxu0
        %v1558 = vadd.f32 0.0, %v1557
        %v1559 = vpop.f32.mrf.mxu0
        %1560 = vmatprep.mubr.f32.mxu0 0.0
        %1561 = vmatmul.mubr.f32.gmra.mxu0 %v1437
        %v1562 = vpop.f32.mrf.mxu0
        %v1563 = vadd.f32 0.0, %v1562
        %v1564 = vpop.f32.mrf.mxu0
        %1565 = vmatprep.mubr.f32.mxu0 0.0
        %1566 = vmatmul.mubr.f32.gmra.mxu0 %v1440
        %v1567 = vpop.f32.mrf.mxu0
        %v1568 = vadd.f32 0.0, %v1567
        %v1569 = vpop.f32.mrf.mxu0
        %1570 = vmatprep.mubr.f32.mxu0 0.0
        %1571 = vmatmul.mubr.f32.gmra.mxu0 %v1443
        %v1572 = vpop.f32.mrf.mxu0
        %v1573 = vadd.f32 0.0, %v1572
        %v1574 = vpop.f32.mrf.mxu0
        %1575 = vmatprep.mubr.f32.mxu0 0.0
        %1576 = vmatmul.mubr.f32.gmra.mxu0 %v1446
        %v1577 = vpop.f32.mrf.mxu0
        %v1578 = vadd.f32 0.0, %v1577
        %v1579 = vpop.f32.mrf.mxu0
        %1580 = vmatprep.mubr.f32.mxu0 0.0
        %1581 = vmatmul.mubr.f32.gmra.mxu0 %v1449
        %v1582 = vpop.f32.mrf.mxu0
        %v1583 = vadd.f32 0.0, %v1582
        %v1584 = vpop.f32.mrf.mxu0
        %1585 = vmatprep.mubr.f32.mxu0 0.0
        %1586 = vmatmul.mubr.f32.gmra.mxu0 %v1452
        %v1587 = vpop.f32.mrf.mxu0
        %v1588 = vadd.f32 0.0, %v1587
        %v1589 = vpop.f32.mrf.mxu0
        %1590 = vmatprep.mubr.f32.mxu0 0.0
        %1591 = vmatmul.mubr.f32.gmra.mxu0 %v1455
        %v1592 = vpop.f32.mrf.mxu0
        %v1593 = vadd.f32 0.0, %v1592
        %v1594 = vpop.f32.mrf.mxu0
        %1595 = vmatprep.mubr.f32.mxu0 0.0
        %1596 = vmatmul.mubr.f32.gmra.mxu0 %v1458
        %v1597 = vpop.f32.mrf.mxu0
        %v1598 = vadd.f32 0.0, %v1597
        %v1599 = vpop.f32.mrf.mxu0
        %1600 = vmatprep.mubr.f32.mxu0 0.0
        %1601 = vmatmul.mubr.f32.gmra.mxu0 %v1461
        %v1602 = vpop.f32.mrf.mxu0
        %v1603 = vadd.f32 0.0, %v1602
        %v1604 = vpop.f32.mrf.mxu0
        %1605 = vmatprep.mubr.f32.mxu0 0.0
        %1606 = vmatmul.mubr.f32.gmra.mxu0 %v1464
        %v1607 = vpop.f32.mrf.mxu0
        %v1608 = vadd.f32 0.0, %v1607
        %v1609 = vpop.f32.mrf.mxu0
        %1610 = vdwg.mxu0
        %v1611 = vadd.f32 %v1381, %v1533
        %v1612 = vadd.f32 %v1382, %v1538
        %v1613 = vadd.f32 %v1383, %v1543
        %v1614 = vadd.f32 %v1384, %v1548
        %v1615 = vadd.f32 %v1385, %v1553
        %v1616 = vadd.f32 %v1386, %v1558
        %v1617 = vadd.f32 %v1387, %v1563
        %v1618 = vadd.f32 %v1388, %v1568
        %v1619 = vadd.f32 %v1389, %v1573
        %v1620 = vadd.f32 %v1390, %v1578
        %v1621 = vadd.f32 %v1391, %v1583
        %v1622 = vadd.f32 %v1392, %v1588
        %v1623 = vadd.f32 %v1393, %v1593
        %v1624 = vadd.f32 %v1394, %v1598
        %v1625 = vadd.f32 %v1395, %v1603
        %v1626 = vadd.f32 %v1396, %v1608
        %v1627 = vld [vmem:[%s1397 + $0x1] sm:$0xff]
        %v1628 = vld [vmem:[%s1397 + $0x9] sm:$0xff]
        %v1629 = vld [vmem:[%s1397 + $0x19] sm:$0xff]
        %v1630 = vld [vmem:[%s1397 + $0x21] sm:$0xff]
        %v1631 = vld [vmem:[%s1397 + $0x31] sm:$0xff]
        %v1632 = vld [vmem:[%s1397 + $0x39] sm:$0xff]
        %v1633 = vld [vmem:[%s1397 + $0x49] sm:$0xff]
        %v1634 = vld [vmem:[%s1397 + $0x51] sm:$0xff]
        %v1635 = vld [vmem:[%s1397 + $0x61] sm:$0xff]
        %v1636 = vld [vmem:[%s1397 + $0x69] sm:$0xff]
        %v1637 = vld [vmem:[%s1397 + $0x79] sm:$0xff]
        %v1638 = vld [vmem:[%s1397 + $0x81] sm:$0xff]
        %v1639 = vld [vmem:[%s1397 + $0x91] sm:$0xff]
        %v1640 = vld [vmem:[%s1397 + $0x99] sm:$0xff]
        %v1641 = vld [vmem:[%s1397 + $0xa9] sm:$0xff]
        %v1642 = vld [vmem:[%s1397 + $0xb1] sm:$0xff]
        %v1643 = vld [vmem:[%s5 + $0x80] sm:$0xff]
        %v1644 = vld [vmem:[%s5 + $0x88] sm:$0xff]
        %v1645 = vld [vmem:[%s5 + $0x90] sm:$0xff]
        %v1646 = vld [vmem:[%s5 + $0x98] sm:$0xff]
        %v1648 = vsel %vm700, %v1627, 0
        %v1651 = vsel %vm700, %v1628, 0
        %v1654 = vsel %vm700, %v1629, 0
        %v1657 = vsel %vm700, %v1630, 0
        %v1660 = vsel %vm700, %v1631, 0
        %v1663 = vsel %vm700, %v1632, 0
        %v1666 = vsel %vm700, %v1633, 0
        %v1669 = vsel %vm700, %v1634, 0
        %v1672 = vsel %vm700, %v1635, 0
        %v1675 = vsel %vm700, %v1636, 0
        %v1678 = vsel %vm700, %v1637, 0
        %v1681 = vsel %vm700, %v1638, 0
        %v1684 = vsel %vm700, %v1639, 0
        %v1687 = vsel %vm700, %v1640, 0
        %v1690 = vsel %vm700, %v1641, 0
        %v1693 = vsel %vm700, %v1642, 0
        %1695 = vmatprep.subr.mxu0 0.0
        %1696 = vmatpush1.msra.mxu0 0.0
        %1697 = vmatprep.subr.mxu0 0.0
        %1698 = vmatpush1.msra.mxu0 0.0
        %1699 = vmatprep.subr.mxu0 0.0
        %1700 = vmatpush1.msra.mxu0 0.0
        %1701 = vmatprep.subr.mxu0 0.0
        %1702 = vmatpush1.msra.mxu0 0.0
        %1703 = vmatprep.subr.mxu0 0.0
        %1704 = vmatpush1.msra.mxu0 0.0
        %1705 = vmatprep.subr.mxu0 0.0
        %1706 = vmatpush1.msra.mxu0 0.0
        %1707 = vmatprep.subr.mxu0 0.0
        %1708 = vmatpush1.msra.mxu0 0.0
        %1709 = vmatprep.subr.mxu0 0.0
        %1710 = vmatpush1.msra.mxu0 0.0
        %1711 = vmatprep.subr.mxu0 0.0
        %1712 = vmatpush1.msra.mxu0 0.0
        %1713 = vmatprep.subr.mxu0 0.0
        %1714 = vmatpush1.msra.mxu0 0.0
        %1715 = vmatprep.subr.mxu0 0.0
        %1716 = vmatpush1.msra.mxu0 0.0
        %1717 = vmatprep.subr.mxu0 0.0
        %1718 = vmatpush1.msra.mxu0 0.0
        %1719 = vmatprep.subr.mxu0 0.0
        %1720 = vmatpush1.msra.mxu0 %v1646
        %1721 = vmatprep.subr.mxu0 0.0
        %1722 = vmatpush1.msra.mxu0 %v1645
        %1723 = vmatprep.subr.mxu0 0.0
        %1724 = vmatpush1.msra.mxu0 %v1644
        %1725 = vmatprep.subr.mxu0 0.0
        %1726 = vmatpush1.msra.mxu0 %v1643
        %1727 = vmatprep.subr.mxu0 0.0
        %1728 = vmatpush2.msra.mxu0 0.0
        %1729 = vmatprep.subr.mxu0 0.0
        %1730 = vmatpush2.msra.mxu0 0.0
        %1731 = vmatprep.subr.mxu0 0.0
        %1732 = vmatpush2.msra.mxu0 0.0
        %1733 = vmatprep.subr.mxu0 0.0
        %1734 = vmatpush2.msra.mxu0 0.0
        %1735 = vmatprep.subr.mxu0 0.0
        %1736 = vmatpush2.msra.mxu0 0.0
        %1737 = vmatprep.subr.mxu0 0.0
        %1738 = vmatpush2.msra.mxu0 0.0
        %1739 = vmatprep.subr.mxu0 0.0
        %1740 = vmatpush2.msra.mxu0 0.0
        %1741 = vmatprep.subr.mxu0 0.0
        %1742 = vmatpush2.msra.mxu0 0.0
        %1743 = vmatprep.subr.mxu0 0.0
        %1744 = vmatpush2.msra.mxu0 0.0
        %1745 = vmatprep.subr.mxu0 0.0
        %1746 = vmatpush2.msra.mxu0 0.0
        %1747 = vmatprep.subr.mxu0 0.0
        %1748 = vmatpush2.msra.mxu0 0.0
        %1749 = vmatprep.subr.mxu0 0.0
        %1750 = vmatpush2.msra.mxu0 0.0
        %1751 = vmatprep.subr.mxu0 0.0
        %1752 = vmatpush2.msra.mxu0 0.0
        %1753 = vmatprep.subr.mxu0 0.0
        %1754 = vmatpush2.msra.mxu0 0.0
        %1755 = vmatprep.subr.mxu0 0.0
        %1756 = vmatpush2.msra.mxu0 0.0
        %1757 = vmatprep.subr.mxu0 0.0
        %1758 = vmatpush2.msra.mxu0 0.0
        %1759 = vmatprep.mubr.f32.mxu0 0.0
        %1760 = vmatmul.mubr.f32.gmra.mxu0 %v1648
        %v1761 = vpop.f32.mrf.mxu0
        %v1762 = vadd.f32 0.0, %v1761
        %v1763 = vpop.f32.mrf.mxu0
        %1764 = vmatprep.mubr.f32.mxu0 0.0
        %1765 = vmatmul.mubr.f32.gmra.mxu0 %v1651
        %v1766 = vpop.f32.mrf.mxu0
        %v1767 = vadd.f32 0.0, %v1766
        %v1768 = vpop.f32.mrf.mxu0
        %1769 = vmatprep.mubr.f32.mxu0 0.0
        %1770 = vmatmul.mubr.f32.gmra.mxu0 %v1654
        %v1771 = vpop.f32.mrf.mxu0
        %v1772 = vadd.f32 0.0, %v1771
        %v1773 = vpop.f32.mrf.mxu0
        %1774 = vmatprep.mubr.f32.mxu0 0.0
        %1775 = vmatmul.mubr.f32.gmra.mxu0 %v1657
        %v1776 = vpop.f32.mrf.mxu0
        %v1777 = vadd.f32 0.0, %v1776
        %v1778 = vpop.f32.mrf.mxu0
        %1779 = vmatprep.mubr.f32.mxu0 0.0
        %1780 = vmatmul.mubr.f32.gmra.mxu0 %v1660
        %v1781 = vpop.f32.mrf.mxu0
        %v1782 = vadd.f32 0.0, %v1781
        %v1783 = vpop.f32.mrf.mxu0
        %1784 = vmatprep.mubr.f32.mxu0 0.0
        %1785 = vmatmul.mubr.f32.gmra.mxu0 %v1663
        %v1786 = vpop.f32.mrf.mxu0
        %v1787 = vadd.f32 0.0, %v1786
        %v1788 = vpop.f32.mrf.mxu0
        %1789 = vmatprep.mubr.f32.mxu0 0.0
        %1790 = vmatmul.mubr.f32.gmra.mxu0 %v1666
        %v1791 = vpop.f32.mrf.mxu0
        %v1792 = vadd.f32 0.0, %v1791
        %v1793 = vpop.f32.mrf.mxu0
        %1794 = vmatprep.mubr.f32.mxu0 0.0
        %1795 = vmatmul.mubr.f32.gmra.mxu0 %v1669
        %v1796 = vpop.f32.mrf.mxu0
        %v1797 = vadd.f32 0.0, %v1796
        %v1798 = vpop.f32.mrf.mxu0
        %1799 = vmatprep.mubr.f32.mxu0 0.0
        %1800 = vmatmul.mubr.f32.gmra.mxu0 %v1672
        %v1801 = vpop.f32.mrf.mxu0
        %v1802 = vadd.f32 0.0, %v1801
        %v1803 = vpop.f32.mrf.mxu0
        %1804 = vmatprep.mubr.f32.mxu0 0.0
        %1805 = vmatmul.mubr.f32.gmra.mxu0 %v1675
        %v1806 = vpop.f32.mrf.mxu0
        %v1807 = vadd.f32 0.0, %v1806
        %v1808 = vpop.f32.mrf.mxu0
        %1809 = vmatprep.mubr.f32.mxu0 0.0
        %1810 = vmatmul.mubr.f32.gmra.mxu0 %v1678
        %v1811 = vpop.f32.mrf.mxu0
        %v1812 = vadd.f32 0.0, %v1811
        %v1813 = vpop.f32.mrf.mxu0
        %1814 = vmatprep.mubr.f32.mxu0 0.0
        %1815 = vmatmul.mubr.f32.gmra.mxu0 %v1681
        %v1816 = vpop.f32.mrf.mxu0
        %v1817 = vadd.f32 0.0, %v1816
        %v1818 = vpop.f32.mrf.mxu0
        %1819 = vmatprep.mubr.f32.mxu0 0.0
        %1820 = vmatmul.mubr.f32.gmra.mxu0 %v1684
        %v1821 = vpop.f32.mrf.mxu0
        %v1822 = vadd.f32 0.0, %v1821
        %v1823 = vpop.f32.mrf.mxu0
        %1824 = vmatprep.mubr.f32.mxu0 0.0
        %1825 = vmatmul.mubr.f32.gmra.mxu0 %v1687
        %v1826 = vpop.f32.mrf.mxu0
        %v1827 = vadd.f32 0.0, %v1826
        %v1828 = vpop.f32.mrf.mxu0
        %1829 = vmatprep.mubr.f32.mxu0 0.0
        %1830 = vmatmul.mubr.f32.gmra.mxu0 %v1690
        %v1831 = vpop.f32.mrf.mxu0
        %v1832 = vadd.f32 0.0, %v1831
        %v1833 = vpop.f32.mrf.mxu0
        %1834 = vmatprep.mubr.f32.mxu0 0.0
        %1835 = vmatmul.mubr.f32.gmra.mxu0 %v1693
        %v1836 = vpop.f32.mrf.mxu0
        %v1837 = vadd.f32 0.0, %v1836
        %v1838 = vpop.f32.mrf.mxu0
        %1839 = vdwg.mxu0
        %v1840 = vadd.f32 %v1611, %v1762
        %v1841 = vadd.f32 %v1612, %v1767
        %v1842 = vadd.f32 %v1613, %v1772
        %v1843 = vadd.f32 %v1614, %v1777
        %v1844 = vadd.f32 %v1615, %v1782
        %v1845 = vadd.f32 %v1616, %v1787
        %v1846 = vadd.f32 %v1617, %v1792
        %v1847 = vadd.f32 %v1618, %v1797
        %v1848 = vadd.f32 %v1619, %v1802
        %v1849 = vadd.f32 %v1620, %v1807
        %v1850 = vadd.f32 %v1621, %v1812
        %v1851 = vadd.f32 %v1622, %v1817
        %v1852 = vadd.f32 %v1623, %v1822
        %v1853 = vadd.f32 %v1624, %v1827
        %v1854 = vadd.f32 %v1625, %v1832
        %v1855 = vadd.f32 %v1626, %v1837
        %v1856 = vld [vmem:[%s1397 + $0x2] sm:$0xff]
        %v1857 = vld [vmem:[%s1397 + $0xa] sm:$0xff]
        %v1858 = vld [vmem:[%s1397 + $0x1a] sm:$0xff]
        %v1859 = vld [vmem:[%s1397 + $0x22] sm:$0xff]
        %v1860 = vld [vmem:[%s1397 + $0x32] sm:$0xff]
        %v1861 = vld [vmem:[%s1397 + $0x3a] sm:$0xff]
        %v1862 = vld [vmem:[%s1397 + $0x4a] sm:$0xff]
        %v1863 = vld [vmem:[%s1397 + $0x52] sm:$0xff]
        %v1864 = vld [vmem:[%s1397 + $0x62] sm:$0xff]
        %v1865 = vld [vmem:[%s1397 + $0x6a] sm:$0xff]
        %v1866 = vld [vmem:[%s1397 + $0x7a] sm:$0xff]
        %v1867 = vld [vmem:[%s1397 + $0x82] sm:$0xff]
        %v1868 = vld [vmem:[%s1397 + $0x92] sm:$0xff]
        %v1869 = vld [vmem:[%s1397 + $0x9a] sm:$0xff]
        %v1870 = vld [vmem:[%s1397 + $0xaa] sm:$0xff]
        %v1871 = vld [vmem:[%s1397 + $0xb2] sm:$0xff]
        %v1872 = vld [vmem:[%s5 + $0xa0] sm:$0xff]
        %v1873 = vld [vmem:[%s5 + $0xa8] sm:$0xff]
        %v1874 = vld [vmem:[%s5 + $0xb0] sm:$0xff]
        %v1875 = vld [vmem:[%s5 + $0xb8] sm:$0xff]
        %v1877 = vsel %vm700, %v1856, 0
        %v1880 = vsel %vm700, %v1857, 0
        %v1883 = vsel %vm700, %v1858, 0
        %v1886 = vsel %vm700, %v1859, 0
        %v1889 = vsel %vm700, %v1860, 0
        %v1892 = vsel %vm700, %v1861, 0
        %v1895 = vsel %vm700, %v1862, 0
        %v1898 = vsel %vm700, %v1863, 0
        %v1901 = vsel %vm700, %v1864, 0
        %v1904 = vsel %vm700, %v1865, 0
        %v1907 = vsel %vm700, %v1866, 0
        %v1910 = vsel %vm700, %v1867, 0
        %v1913 = vsel %vm700, %v1868, 0
        %v1916 = vsel %vm700, %v1869, 0
        %v1919 = vsel %vm700, %v1870, 0
        %v1922 = vsel %vm700, %v1871, 0
        %1924 = vmatprep.subr.mxu0 0.0
        %1925 = vmatpush1.msra.mxu0 0.0
        %1926 = vmatprep.subr.mxu0 0.0
        %1927 = vmatpush1.msra.mxu0 0.0
        %1928 = vmatprep.subr.mxu0 0.0
        %1929 = vmatpush1.msra.mxu0 0.0
        %1930 = vmatprep.subr.mxu0 0.0
        %1931 = vmatpush1.msra.mxu0 0.0
        %1932 = vmatprep.subr.mxu0 0.0
        %1933 = vmatpush1.msra.mxu0 0.0
        %1934 = vmatprep.subr.mxu0 0.0
        %1935 = vmatpush1.msra.mxu0 0.0
        %1936 = vmatprep.subr.mxu0 0.0
        %1937 = vmatpush1.msra.mxu0 0.0
        %1938 = vmatprep.subr.mxu0 0.0
        %1939 = vmatpush1.msra.mxu0 0.0
        %1940 = vmatprep.subr.mxu0 0.0
        %1941 = vmatpush1.msra.mxu0 0.0
        %1942 = vmatprep.subr.mxu0 0.0
        %1943 = vmatpush1.msra.mxu0 0.0
        %1944 = vmatprep.subr.mxu0 0.0
        %1945 = vmatpush1.msra.mxu0 0.0
        %1946 = vmatprep.subr.mxu0 0.0
        %1947 = vmatpush1.msra.mxu0 0.0
        %1948 = vmatprep.subr.mxu0 0.0
        %1949 = vmatpush1.msra.mxu0 %v1875
        %1950 = vmatprep.subr.mxu0 0.0
        %1951 = vmatpush1.msra.mxu0 %v1874
        %1952 = vmatprep.subr.mxu0 0.0
        %1953 = vmatpush1.msra.mxu0 %v1873
        %1954 = vmatprep.subr.mxu0 0.0
        %1955 = vmatpush1.msra.mxu0 %v1872
        %1956 = vmatprep.subr.mxu0 0.0
        %1957 = vmatpush2.msra.mxu0 0.0
        %1958 = vmatprep.subr.mxu0 0.0
        %1959 = vmatpush2.msra.mxu0 0.0
        %1960 = vmatprep.subr.mxu0 0.0
        %1961 = vmatpush2.msra.mxu0 0.0
        %1962 = vmatprep.subr.mxu0 0.0
        %1963 = vmatpush2.msra.mxu0 0.0
        %1964 = vmatprep.subr.mxu0 0.0
        %1965 = vmatpush2.msra.mxu0 0.0
        %1966 = vmatprep.subr.mxu0 0.0
        %1967 = vmatpush2.msra.mxu0 0.0
        %1968 = vmatprep.subr.mxu0 0.0
        %1969 = vmatpush2.msra.mxu0 0.0
        %1970 = vmatprep.subr.mxu0 0.0
        %1971 = vmatpush2.msra.mxu0 0.0
        %1972 = vmatprep.subr.mxu0 0.0
        %1973 = vmatpush2.msra.mxu0 0.0
        %1974 = vmatprep.subr.mxu0 0.0
        %1975 = vmatpush2.msra.mxu0 0.0
        %1976 = vmatprep.subr.mxu0 0.0
        %1977 = vmatpush2.msra.mxu0 0.0
        %1978 = vmatprep.subr.mxu0 0.0
        %1979 = vmatpush2.msra.mxu0 0.0
        %1980 = vmatprep.subr.mxu0 0.0
        %1981 = vmatpush2.msra.mxu0 0.0
        %1982 = vmatprep.subr.mxu0 0.0
        %1983 = vmatpush2.msra.mxu0 0.0
        %1984 = vmatprep.subr.mxu0 0.0
        %1985 = vmatpush2.msra.mxu0 0.0
        %1986 = vmatprep.subr.mxu0 0.0
        %1987 = vmatpush2.msra.mxu0 0.0
        %1988 = vmatprep.mubr.f32.mxu0 0.0
        %1989 = vmatmul.mubr.f32.gmra.mxu0 %v1877
        %v1990 = vpop.f32.mrf.mxu0
        %v1991 = vadd.f32 0.0, %v1990
        %v1992 = vpop.f32.mrf.mxu0
        %1993 = vmatprep.mubr.f32.mxu0 0.0
        %1994 = vmatmul.mubr.f32.gmra.mxu0 %v1880
        %v1995 = vpop.f32.mrf.mxu0
        %v1996 = vadd.f32 0.0, %v1995
        %v1997 = vpop.f32.mrf.mxu0
        %1998 = vmatprep.mubr.f32.mxu0 0.0
        %1999 = vmatmul.mubr.f32.gmra.mxu0 %v1883
        %v2000 = vpop.f32.mrf.mxu0
        %v2001 = vadd.f32 0.0, %v2000
        %v2002 = vpop.f32.mrf.mxu0
        %2003 = vmatprep.mubr.f32.mxu0 0.0
        %2004 = vmatmul.mubr.f32.gmra.mxu0 %v1886
        %v2005 = vpop.f32.mrf.mxu0
        %v2006 = vadd.f32 0.0, %v2005
        %v2007 = vpop.f32.mrf.mxu0
        %2008 = vmatprep.mubr.f32.mxu0 0.0
        %2009 = vmatmul.mubr.f32.gmra.mxu0 %v1889
        %v2010 = vpop.f32.mrf.mxu0
        %v2011 = vadd.f32 0.0, %v2010
        %v2012 = vpop.f32.mrf.mxu0
        %2013 = vmatprep.mubr.f32.mxu0 0.0
        %2014 = vmatmul.mubr.f32.gmra.mxu0 %v1892
        %v2015 = vpop.f32.mrf.mxu0
        %v2016 = vadd.f32 0.0, %v2015
        %v2017 = vpop.f32.mrf.mxu0
        %2018 = vmatprep.mubr.f32.mxu0 0.0
        %2019 = vmatmul.mubr.f32.gmra.mxu0 %v1895
        %v2020 = vpop.f32.mrf.mxu0
        %v2021 = vadd.f32 0.0, %v2020
        %v2022 = vpop.f32.mrf.mxu0
        %2023 = vmatprep.mubr.f32.mxu0 0.0
        %2024 = vmatmul.mubr.f32.gmra.mxu0 %v1898
        %v2025 = vpop.f32.mrf.mxu0
        %v2026 = vadd.f32 0.0, %v2025
        %v2027 = vpop.f32.mrf.mxu0
        %2028 = vmatprep.mubr.f32.mxu0 0.0
        %2029 = vmatmul.mubr.f32.gmra.mxu0 %v1901
        %v2030 = vpop.f32.mrf.mxu0
        %v2031 = vadd.f32 0.0, %v2030
        %v2032 = vpop.f32.mrf.mxu0
        %2033 = vmatprep.mubr.f32.mxu0 0.0
        %2034 = vmatmul.mubr.f32.gmra.mxu0 %v1904
        %v2035 = vpop.f32.mrf.mxu0
        %v2036 = vadd.f32 0.0, %v2035
        %v2037 = vpop.f32.mrf.mxu0
        %2038 = vmatprep.mubr.f32.mxu0 0.0
        %2039 = vmatmul.mubr.f32.gmra.mxu0 %v1907
        %v2040 = vpop.f32.mrf.mxu0
        %v2041 = vadd.f32 0.0, %v2040
        %v2042 = vpop.f32.mrf.mxu0
        %2043 = vmatprep.mubr.f32.mxu0 0.0
        %2044 = vmatmul.mubr.f32.gmra.mxu0 %v1910
        %v2045 = vpop.f32.mrf.mxu0
        %v2046 = vadd.f32 0.0, %v2045
        %v2047 = vpop.f32.mrf.mxu0
        %2048 = vmatprep.mubr.f32.mxu0 0.0
        %2049 = vmatmul.mubr.f32.gmra.mxu0 %v1913
        %v2050 = vpop.f32.mrf.mxu0
        %v2051 = vadd.f32 0.0, %v2050
        %v2052 = vpop.f32.mrf.mxu0
        %2053 = vmatprep.mubr.f32.mxu0 0.0
        %2054 = vmatmul.mubr.f32.gmra.mxu0 %v1916
        %v2055 = vpop.f32.mrf.mxu0
        %v2056 = vadd.f32 0.0, %v2055
        %v2057 = vpop.f32.mrf.mxu0
        %2058 = vmatprep.mubr.f32.mxu0 0.0
        %2059 = vmatmul.mubr.f32.gmra.mxu0 %v1919
        %v2060 = vpop.f32.mrf.mxu0
        %v2061 = vadd.f32 0.0, %v2060
        %v2062 = vpop.f32.mrf.mxu0
        %2063 = vmatprep.mubr.f32.mxu0 0.0
        %2064 = vmatmul.mubr.f32.gmra.mxu0 %v1922
        %v2065 = vpop.f32.mrf.mxu0
        %v2066 = vadd.f32 0.0, %v2065
        %v2067 = vpop.f32.mrf.mxu0
        %2068 = vdwg.mxu0
        %v2069 = vadd.f32 %v1840, %v1991
        %v2070 = vadd.f32 %v1841, %v1996
        %v2071 = vadd.f32 %v1842, %v2001
        %v2072 = vadd.f32 %v1843, %v2006
        %v2073 = vadd.f32 %v1844, %v2011
        %v2074 = vadd.f32 %v1845, %v2016
        %v2075 = vadd.f32 %v1846, %v2021
        %v2076 = vadd.f32 %v1847, %v2026
        %v2077 = vadd.f32 %v1848, %v2031
        %v2078 = vadd.f32 %v1849, %v2036
        %v2079 = vadd.f32 %v1850, %v2041
        %v2080 = vadd.f32 %v1851, %v2046
        %v2081 = vadd.f32 %v1852, %v2051
        %v2082 = vadd.f32 %v1853, %v2056
        %v2083 = vadd.f32 %v1854, %v2061
        %v2084 = vadd.f32 %v1855, %v2066
        %s2085 = scalar_lea.vmem [#allocation2], 48
        %v2086 = vld [vmem:[%s2085] sm:$0xff]
        %v2087 = vld [vmem:[%s2085 + $0x8] sm:$0xff]
        %v2088 = vld [vmem:[%s2085 + $0x18] sm:$0xff]
        %v2089 = vld [vmem:[%s2085 + $0x20] sm:$0xff]
        %v2090 = vld [vmem:[%s2085 + $0x30] sm:$0xff]
        %v2091 = vld [vmem:[%s2085 + $0x38] sm:$0xff]
        %v2092 = vld [vmem:[%s2085 + $0x48] sm:$0xff]
        %v2093 = vld [vmem:[%s2085 + $0x50] sm:$0xff]
        %v2094 = vld [vmem:[%s2085 + $0x60] sm:$0xff]
        %v2095 = vld [vmem:[%s2085 + $0x68] sm:$0xff]
        %v2096 = vld [vmem:[%s2085 + $0x78] sm:$0xff]
        %v2097 = vld [vmem:[%s2085 + $0x80] sm:$0xff]
        %v2098 = vld [vmem:[%s2085 + $0x90] sm:$0xff]
        %v2099 = vld [vmem:[%s2085 + $0x98] sm:$0xff]
        %v2100 = vld [vmem:[%s2085 + $0xa8] sm:$0xff]
        %v2101 = vld [vmem:[%s2085 + $0xb0] sm:$0xff]
        %v2102 = vld [vmem:[%s5 + $0xc0] sm:$0xff]
        %v2103 = vld [vmem:[%s5 + $0xc8] sm:$0xff]
        %v2104 = vld [vmem:[%s5 + $0xd0] sm:$0xff]
        %v2105 = vld [vmem:[%s5 + $0xd8] sm:$0xff]
        %v2107 = vsel %vm700, %v2086, 0
        %v2110 = vsel %vm700, %v2087, 0
        %v2113 = vsel %vm700, %v2088, 0
        %v2116 = vsel %vm700, %v2089, 0
        %v2119 = vsel %vm700, %v2090, 0
        %v2122 = vsel %vm700, %v2091, 0
        %v2125 = vsel %vm700, %v2092, 0
        %v2128 = vsel %vm700, %v2093, 0
        %v2131 = vsel %vm700, %v2094, 0
        %v2134 = vsel %vm700, %v2095, 0
        %v2137 = vsel %vm700, %v2096, 0
        %v2140 = vsel %vm700, %v2097, 0
        %v2143 = vsel %vm700, %v2098, 0
        %v2146 = vsel %vm700, %v2099, 0
        %v2149 = vsel %vm700, %v2100, 0
        %v2152 = vsel %vm700, %v2101, 0
        %2154 = vmatprep.subr.mxu0 0.0
        %2155 = vmatpush1.msra.mxu0 0.0
        %2156 = vmatprep.subr.mxu0 0.0
        %2157 = vmatpush1.msra.mxu0 0.0
        %2158 = vmatprep.subr.mxu0 0.0
        %2159 = vmatpush1.msra.mxu0 0.0
        %2160 = vmatprep.subr.mxu0 0.0
        %2161 = vmatpush1.msra.mxu0 0.0
        %2162 = vmatprep.subr.mxu0 0.0
        %2163 = vmatpush1.msra.mxu0 0.0
        %2164 = vmatprep.subr.mxu0 0.0
        %2165 = vmatpush1.msra.mxu0 0.0
        %2166 = vmatprep.subr.mxu0 0.0
        %2167 = vmatpush1.msra.mxu0 0.0
        %2168 = vmatprep.subr.mxu0 0.0
        %2169 = vmatpush1.msra.mxu0 0.0
        %2170 = vmatprep.subr.mxu0 0.0
        %2171 = vmatpush1.msra.mxu0 0.0
        %2172 = vmatprep.subr.mxu0 0.0
        %2173 = vmatpush1.msra.mxu0 0.0
        %2174 = vmatprep.subr.mxu0 0.0
        %2175 = vmatpush1.msra.mxu0 0.0
        %2176 = vmatprep.subr.mxu0 0.0
        %2177 = vmatpush1.msra.mxu0 0.0
        %2178 = vmatprep.subr.mxu0 0.0
        %2179 = vmatpush1.msra.mxu0 %v2105
        %2180 = vmatprep.subr.mxu0 0.0
        %2181 = vmatpush1.msra.mxu0 %v2104
        %2182 = vmatprep.subr.mxu0 0.0
        %2183 = vmatpush1.msra.mxu0 %v2103
        %2184 = vmatprep.subr.mxu0 0.0
        %2185 = vmatpush1.msra.mxu0 %v2102
        %2186 = vmatprep.subr.mxu0 0.0
        %2187 = vmatpush2.msra.mxu0 0.0
        %2188 = vmatprep.subr.mxu0 0.0
        %2189 = vmatpush2.msra.mxu0 0.0
        %2190 = vmatprep.subr.mxu0 0.0
        %2191 = vmatpush2.msra.mxu0 0.0
        %2192 = vmatprep.subr.mxu0 0.0
        %2193 = vmatpush2.msra.mxu0 0.0
        %2194 = vmatprep.subr.mxu0 0.0
        %2195 = vmatpush2.msra.mxu0 0.0
        %2196 = vmatprep.subr.mxu0 0.0
        %2197 = vmatpush2.msra.mxu0 0.0
        %2198 = vmatprep.subr.mxu0 0.0
        %2199 = vmatpush2.msra.mxu0 0.0
        %2200 = vmatprep.subr.mxu0 0.0
        %2201 = vmatpush2.msra.mxu0 0.0
        %2202 = vmatprep.subr.mxu0 0.0
        %2203 = vmatpush2.msra.mxu0 0.0
        %2204 = vmatprep.subr.mxu0 0.0
        %2205 = vmatpush2.msra.mxu0 0.0
        %2206 = vmatprep.subr.mxu0 0.0
        %2207 = vmatpush2.msra.mxu0 0.0
        %2208 = vmatprep.subr.mxu0 0.0
        %2209 = vmatpush2.msra.mxu0 0.0
        %2210 = vmatprep.subr.mxu0 0.0
        %2211 = vmatpush2.msra.mxu0 0.0
        %2212 = vmatprep.subr.mxu0 0.0
        %2213 = vmatpush2.msra.mxu0 0.0
        %2214 = vmatprep.subr.mxu0 0.0
        %2215 = vmatpush2.msra.mxu0 0.0
        %2216 = vmatprep.subr.mxu0 0.0
        %2217 = vmatpush2.msra.mxu0 0.0
        %2218 = vmatprep.mubr.f32.mxu0 0.0
        %2219 = vmatmul.mubr.f32.gmra.mxu0 %v2107
        %v2220 = vpop.f32.mrf.mxu0
        %v2221 = vadd.f32 0.0, %v2220
        %v2222 = vpop.f32.mrf.mxu0
        %2223 = vmatprep.mubr.f32.mxu0 0.0
        %2224 = vmatmul.mubr.f32.gmra.mxu0 %v2110
        %v2225 = vpop.f32.mrf.mxu0
        %v2226 = vadd.f32 0.0, %v2225
        %v2227 = vpop.f32.mrf.mxu0
        %2228 = vmatprep.mubr.f32.mxu0 0.0
        %2229 = vmatmul.mubr.f32.gmra.mxu0 %v2113
        %v2230 = vpop.f32.mrf.mxu0
        %v2231 = vadd.f32 0.0, %v2230
        %v2232 = vpop.f32.mrf.mxu0
        %2233 = vmatprep.mubr.f32.mxu0 0.0
        %2234 = vmatmul.mubr.f32.gmra.mxu0 %v2116
        %v2235 = vpop.f32.mrf.mxu0
        %v2236 = vadd.f32 0.0, %v2235
        %v2237 = vpop.f32.mrf.mxu0
        %2238 = vmatprep.mubr.f32.mxu0 0.0
        %2239 = vmatmul.mubr.f32.gmra.mxu0 %v2119
        %v2240 = vpop.f32.mrf.mxu0
        %v2241 = vadd.f32 0.0, %v2240
        %v2242 = vpop.f32.mrf.mxu0
        %2243 = vmatprep.mubr.f32.mxu0 0.0
        %2244 = vmatmul.mubr.f32.gmra.mxu0 %v2122
        %v2245 = vpop.f32.mrf.mxu0
        %v2246 = vadd.f32 0.0, %v2245
        %v2247 = vpop.f32.mrf.mxu0
        %2248 = vmatprep.mubr.f32.mxu0 0.0
        %2249 = vmatmul.mubr.f32.gmra.mxu0 %v2125
        %v2250 = vpop.f32.mrf.mxu0
        %v2251 = vadd.f32 0.0, %v2250
        %v2252 = vpop.f32.mrf.mxu0
        %2253 = vmatprep.mubr.f32.mxu0 0.0
        %2254 = vmatmul.mubr.f32.gmra.mxu0 %v2128
        %v2255 = vpop.f32.mrf.mxu0
        %v2256 = vadd.f32 0.0, %v2255
        %v2257 = vpop.f32.mrf.mxu0
        %2258 = vmatprep.mubr.f32.mxu0 0.0
        %2259 = vmatmul.mubr.f32.gmra.mxu0 %v2131
        %v2260 = vpop.f32.mrf.mxu0
        %v2261 = vadd.f32 0.0, %v2260
        %v2262 = vpop.f32.mrf.mxu0
        %2263 = vmatprep.mubr.f32.mxu0 0.0
        %2264 = vmatmul.mubr.f32.gmra.mxu0 %v2134
        %v2265 = vpop.f32.mrf.mxu0
        %v2266 = vadd.f32 0.0, %v2265
        %v2267 = vpop.f32.mrf.mxu0
        %2268 = vmatprep.mubr.f32.mxu0 0.0
        %2269 = vmatmul.mubr.f32.gmra.mxu0 %v2137
        %v2270 = vpop.f32.mrf.mxu0
        %v2271 = vadd.f32 0.0, %v2270
        %v2272 = vpop.f32.mrf.mxu0
        %2273 = vmatprep.mubr.f32.mxu0 0.0
        %2274 = vmatmul.mubr.f32.gmra.mxu0 %v2140
        %v2275 = vpop.f32.mrf.mxu0
        %v2276 = vadd.f32 0.0, %v2275
        %v2277 = vpop.f32.mrf.mxu0
        %2278 = vmatprep.mubr.f32.mxu0 0.0
        %2279 = vmatmul.mubr.f32.gmra.mxu0 %v2143
        %v2280 = vpop.f32.mrf.mxu0
        %v2281 = vadd.f32 0.0, %v2280
        %v2282 = vpop.f32.mrf.mxu0
        %2283 = vmatprep.mubr.f32.mxu0 0.0
        %2284 = vmatmul.mubr.f32.gmra.mxu0 %v2146
        %v2285 = vpop.f32.mrf.mxu0
        %v2286 = vadd.f32 0.0, %v2285
        %v2287 = vpop.f32.mrf.mxu0
        %2288 = vmatprep.mubr.f32.mxu0 0.0
        %2289 = vmatmul.mubr.f32.gmra.mxu0 %v2149
        %v2290 = vpop.f32.mrf.mxu0
        %v2291 = vadd.f32 0.0, %v2290
        %v2292 = vpop.f32.mrf.mxu0
        %2293 = vmatprep.mubr.f32.mxu0 0.0
        %2294 = vmatmul.mubr.f32.gmra.mxu0 %v2152
        %v2295 = vpop.f32.mrf.mxu0
        %v2296 = vadd.f32 0.0, %v2295
        %v2297 = vpop.f32.mrf.mxu0
        %2298 = vdwg.mxu0
        %v2299 = vadd.f32 %v2069, %v2221
        %v2300 = vadd.f32 %v2070, %v2226
        %v2301 = vadd.f32 %v2071, %v2231
        %v2302 = vadd.f32 %v2072, %v2236
        %v2303 = vadd.f32 %v2073, %v2241
        %v2304 = vadd.f32 %v2074, %v2246
        %v2305 = vadd.f32 %v2075, %v2251
        %v2306 = vadd.f32 %v2076, %v2256
        %v2307 = vadd.f32 %v2077, %v2261
        %v2308 = vadd.f32 %v2078, %v2266
        %v2309 = vadd.f32 %v2079, %v2271
        %v2310 = vadd.f32 %v2080, %v2276
        %v2311 = vadd.f32 %v2081, %v2281
        %v2312 = vadd.f32 %v2082, %v2286
        %v2313 = vadd.f32 %v2083, %v2291
        %v2314 = vadd.f32 %v2084, %v2296
        %v2315 = vld [vmem:[%s2085 + $0x1] sm:$0xff]
        %v2316 = vld [vmem:[%s2085 + $0x9] sm:$0xff]
        %v2317 = vld [vmem:[%s2085 + $0x19] sm:$0xff]
        %v2318 = vld [vmem:[%s2085 + $0x21] sm:$0xff]
        %v2319 = vld [vmem:[%s2085 + $0x31] sm:$0xff]
        %v2320 = vld [vmem:[%s2085 + $0x39] sm:$0xff]
        %v2321 = vld [vmem:[%s2085 + $0x49] sm:$0xff]
        %v2322 = vld [vmem:[%s2085 + $0x51] sm:$0xff]
        %v2323 = vld [vmem:[%s2085 + $0x61] sm:$0xff]
        %v2324 = vld [vmem:[%s2085 + $0x69] sm:$0xff]
        %v2325 = vld [vmem:[%s2085 + $0x79] sm:$0xff]
        %v2326 = vld [vmem:[%s2085 + $0x81] sm:$0xff]
        %v2327 = vld [vmem:[%s2085 + $0x91] sm:$0xff]
        %v2328 = vld [vmem:[%s2085 + $0x99] sm:$0xff]
        %v2329 = vld [vmem:[%s2085 + $0xa9] sm:$0xff]
        %v2330 = vld [vmem:[%s2085 + $0xb1] sm:$0xff]
        %v2331 = vld [vmem:[%s5 + $0xe0] sm:$0xff]
        %v2332 = vld [vmem:[%s5 + $0xe8] sm:$0xff]
        %v2333 = vld [vmem:[%s5 + $0xf0] sm:$0xff]
        %v2334 = vld [vmem:[%s5 + $0xf8] sm:$0xff]
        %v2336 = vsel %vm700, %v2315, 0
        %v2339 = vsel %vm700, %v2316, 0
        %v2342 = vsel %vm700, %v2317, 0
        %v2345 = vsel %vm700, %v2318, 0
        %v2348 = vsel %vm700, %v2319, 0
        %v2351 = vsel %vm700, %v2320, 0
        %v2354 = vsel %vm700, %v2321, 0
        %v2357 = vsel %vm700, %v2322, 0
        %v2360 = vsel %vm700, %v2323, 0
        %v2363 = vsel %vm700, %v2324, 0
        %v2366 = vsel %vm700, %v2325, 0
        %v2369 = vsel %vm700, %v2326, 0
        %v2372 = vsel %vm700, %v2327, 0
        %v2375 = vsel %vm700, %v2328, 0
        %v2378 = vsel %vm700, %v2329, 0
        %v2381 = vsel %vm700, %v2330, 0
        %2383 = vmatprep.subr.mxu0 0.0
        %2384 = vmatpush1.msra.mxu0 0.0
        %2385 = vmatprep.subr.mxu0 0.0
        %2386 = vmatpush1.msra.mxu0 0.0
        %2387 = vmatprep.subr.mxu0 0.0
        %2388 = vmatpush1.msra.mxu0 0.0
        %2389 = vmatprep.subr.mxu0 0.0
        %2390 = vmatpush1.msra.mxu0 0.0
        %2391 = vmatprep.subr.mxu0 0.0
        %2392 = vmatpush1.msra.mxu0 0.0
        %2393 = vmatprep.subr.mxu0 0.0
        %2394 = vmatpush1.msra.mxu0 0.0
        %2395 = vmatprep.subr.mxu0 0.0
        %2396 = vmatpush1.msra.mxu0 0.0
        %2397 = vmatprep.subr.mxu0 0.0
        %2398 = vmatpush1.msra.mxu0 0.0
        %2399 = vmatprep.subr.mxu0 0.0
        %2400 = vmatpush1.msra.mxu0 0.0
        %2401 = vmatprep.subr.mxu0 0.0
        %2402 = vmatpush1.msra.mxu0 0.0
        %2403 = vmatprep.subr.mxu0 0.0
        %2404 = vmatpush1.msra.mxu0 0.0
        %2405 = vmatprep.subr.mxu0 0.0
        %2406 = vmatpush1.msra.mxu0 0.0
        %2407 = vmatprep.subr.mxu0 0.0
        %2408 = vmatpush1.msra.mxu0 %v2334
        %2409 = vmatprep.subr.mxu0 0.0
        %2410 = vmatpush1.msra.mxu0 %v2333
        %2411 = vmatprep.subr.mxu0 0.0
        %2412 = vmatpush1.msra.mxu0 %v2332
        %2413 = vmatprep.subr.mxu0 0.0
        %2414 = vmatpush1.msra.mxu0 %v2331
        %2415 = vmatprep.subr.mxu0 0.0
        %2416 = vmatpush2.msra.mxu0 0.0
        %2417 = vmatprep.subr.mxu0 0.0
        %2418 = vmatpush2.msra.mxu0 0.0
        %2419 = vmatprep.subr.mxu0 0.0
        %2420 = vmatpush2.msra.mxu0 0.0
        %2421 = vmatprep.subr.mxu0 0.0
        %2422 = vmatpush2.msra.mxu0 0.0
        %2423 = vmatprep.subr.mxu0 0.0
        %2424 = vmatpush2.msra.mxu0 0.0
        %2425 = vmatprep.subr.mxu0 0.0
        %2426 = vmatpush2.msra.mxu0 0.0
        %2427 = vmatprep.subr.mxu0 0.0
        %2428 = vmatpush2.msra.mxu0 0.0
        %2429 = vmatprep.subr.mxu0 0.0
        %2430 = vmatpush2.msra.mxu0 0.0
        %2431 = vmatprep.subr.mxu0 0.0
        %2432 = vmatpush2.msra.mxu0 0.0
        %2433 = vmatprep.subr.mxu0 0.0
        %2434 = vmatpush2.msra.mxu0 0.0
        %2435 = vmatprep.subr.mxu0 0.0
        %2436 = vmatpush2.msra.mxu0 0.0
        %2437 = vmatprep.subr.mxu0 0.0
        %2438 = vmatpush2.msra.mxu0 0.0
        %2439 = vmatprep.subr.mxu0 0.0
        %2440 = vmatpush2.msra.mxu0 0.0
        %2441 = vmatprep.subr.mxu0 0.0
        %2442 = vmatpush2.msra.mxu0 0.0
        %2443 = vmatprep.subr.mxu0 0.0
        %2444 = vmatpush2.msra.mxu0 0.0
        %2445 = vmatprep.subr.mxu0 0.0
        %2446 = vmatpush2.msra.mxu0 0.0
        %2447 = vmatprep.mubr.f32.mxu0 0.0
        %2448 = vmatmul.mubr.f32.gmra.mxu0 %v2336
        %v2449 = vpop.f32.mrf.mxu0
        %v2450 = vadd.f32 0.0, %v2449
        %v2451 = vpop.f32.mrf.mxu0
        %2452 = vmatprep.mubr.f32.mxu0 0.0
        %2453 = vmatmul.mubr.f32.gmra.mxu0 %v2339
        %v2454 = vpop.f32.mrf.mxu0
        %v2455 = vadd.f32 0.0, %v2454
        %v2456 = vpop.f32.mrf.mxu0
        %2457 = vmatprep.mubr.f32.mxu0 0.0
        %2458 = vmatmul.mubr.f32.gmra.mxu0 %v2342
        %v2459 = vpop.f32.mrf.mxu0
        %v2460 = vadd.f32 0.0, %v2459
        %v2461 = vpop.f32.mrf.mxu0
        %2462 = vmatprep.mubr.f32.mxu0 0.0
        %2463 = vmatmul.mubr.f32.gmra.mxu0 %v2345
        %v2464 = vpop.f32.mrf.mxu0
        %v2465 = vadd.f32 0.0, %v2464
        %v2466 = vpop.f32.mrf.mxu0
        %2467 = vmatprep.mubr.f32.mxu0 0.0
        %2468 = vmatmul.mubr.f32.gmra.mxu0 %v2348
        %v2469 = vpop.f32.mrf.mxu0
        %v2470 = vadd.f32 0.0, %v2469
        %v2471 = vpop.f32.mrf.mxu0
        %2472 = vmatprep.mubr.f32.mxu0 0.0
        %2473 = vmatmul.mubr.f32.gmra.mxu0 %v2351
        %v2474 = vpop.f32.mrf.mxu0
        %v2475 = vadd.f32 0.0, %v2474
        %v2476 = vpop.f32.mrf.mxu0
        %2477 = vmatprep.mubr.f32.mxu0 0.0
        %2478 = vmatmul.mubr.f32.gmra.mxu0 %v2354
        %v2479 = vpop.f32.mrf.mxu0
        %v2480 = vadd.f32 0.0, %v2479
        %v2481 = vpop.f32.mrf.mxu0
        %2482 = vmatprep.mubr.f32.mxu0 0.0
        %2483 = vmatmul.mubr.f32.gmra.mxu0 %v2357
        %v2484 = vpop.f32.mrf.mxu0
        %v2485 = vadd.f32 0.0, %v2484
        %v2486 = vpop.f32.mrf.mxu0
        %2487 = vmatprep.mubr.f32.mxu0 0.0
        %2488 = vmatmul.mubr.f32.gmra.mxu0 %v2360
        %v2489 = vpop.f32.mrf.mxu0
        %v2490 = vadd.f32 0.0, %v2489
        %v2491 = vpop.f32.mrf.mxu0
        %2492 = vmatprep.mubr.f32.mxu0 0.0
        %2493 = vmatmul.mubr.f32.gmra.mxu0 %v2363
        %v2494 = vpop.f32.mrf.mxu0
        %v2495 = vadd.f32 0.0, %v2494
        %v2496 = vpop.f32.mrf.mxu0
        %2497 = vmatprep.mubr.f32.mxu0 0.0
        %2498 = vmatmul.mubr.f32.gmra.mxu0 %v2366
        %v2499 = vpop.f32.mrf.mxu0
        %v2500 = vadd.f32 0.0, %v2499
        %v2501 = vpop.f32.mrf.mxu0
        %2502 = vmatprep.mubr.f32.mxu0 0.0
        %2503 = vmatmul.mubr.f32.gmra.mxu0 %v2369
        %v2504 = vpop.f32.mrf.mxu0
        %v2505 = vadd.f32 0.0, %v2504
        %v2506 = vpop.f32.mrf.mxu0
        %2507 = vmatprep.mubr.f32.mxu0 0.0
        %2508 = vmatmul.mubr.f32.gmra.mxu0 %v2372
        %v2509 = vpop.f32.mrf.mxu0
        %v2510 = vadd.f32 0.0, %v2509
        %v2511 = vpop.f32.mrf.mxu0
        %2512 = vmatprep.mubr.f32.mxu0 0.0
        %2513 = vmatmul.mubr.f32.gmra.mxu0 %v2375
        %v2514 = vpop.f32.mrf.mxu0
        %v2515 = vadd.f32 0.0, %v2514
        %v2516 = vpop.f32.mrf.mxu0
        %2517 = vmatprep.mubr.f32.mxu0 0.0
        %2518 = vmatmul.mubr.f32.gmra.mxu0 %v2378
        %v2519 = vpop.f32.mrf.mxu0
        %v2520 = vadd.f32 0.0, %v2519
        %v2521 = vpop.f32.mrf.mxu0
        %2522 = vmatprep.mubr.f32.mxu0 0.0
        %2523 = vmatmul.mubr.f32.gmra.mxu0 %v2381
        %v2524 = vpop.f32.mrf.mxu0
        %v2525 = vadd.f32 0.0, %v2524
        %v2526 = vpop.f32.mrf.mxu0
        %2527 = vdwg.mxu0
        %v2528 = vadd.f32 %v2299, %v2450
        %v2529 = vadd.f32 %v2300, %v2455
        %v2530 = vadd.f32 %v2301, %v2460
        %v2531 = vadd.f32 %v2302, %v2465
        %v2532 = vadd.f32 %v2303, %v2470
        %v2533 = vadd.f32 %v2304, %v2475
        %v2534 = vadd.f32 %v2305, %v2480
        %v2535 = vadd.f32 %v2306, %v2485
        %v2536 = vadd.f32 %v2307, %v2490
        %v2537 = vadd.f32 %v2308, %v2495
        %v2538 = vadd.f32 %v2309, %v2500
        %v2539 = vadd.f32 %v2310, %v2505
        %v2540 = vadd.f32 %v2311, %v2510
        %v2541 = vadd.f32 %v2312, %v2515
        %v2542 = vadd.f32 %v2313, %v2520
        %v2543 = vadd.f32 %v2314, %v2525
        %v2544 = vld [vmem:[%s2085 + $0x2] sm:$0xff]
        %v2545 = vld [vmem:[%s2085 + $0xa] sm:$0xff]
        %v2546 = vld [vmem:[%s2085 + $0x1a] sm:$0xff]
        %v2547 = vld [vmem:[%s2085 + $0x22] sm:$0xff]
        %v2548 = vld [vmem:[%s2085 + $0x32] sm:$0xff]
        %v2549 = vld [vmem:[%s2085 + $0x3a] sm:$0xff]
        %v2550 = vld [vmem:[%s2085 + $0x4a] sm:$0xff]
        %v2551 = vld [vmem:[%s2085 + $0x52] sm:$0xff]
        %v2552 = vld [vmem:[%s2085 + $0x62] sm:$0xff]
        %v2553 = vld [vmem:[%s2085 + $0x6a] sm:$0xff]
        %v2554 = vld [vmem:[%s2085 + $0x7a] sm:$0xff]
        %v2555 = vld [vmem:[%s2085 + $0x82] sm:$0xff]
        %v2556 = vld [vmem:[%s2085 + $0x92] sm:$0xff]
        %v2557 = vld [vmem:[%s2085 + $0x9a] sm:$0xff]
        %v2558 = vld [vmem:[%s2085 + $0xaa] sm:$0xff]
        %v2559 = vld [vmem:[%s2085 + $0xb2] sm:$0xff]
        %v2560 = vld [vmem:[%s5 + $0x100] sm:$0xff]
        %v2561 = vld [vmem:[%s5 + $0x108] sm:$0xff]
        %v2562 = vld [vmem:[%s5 + $0x110] sm:$0xff]
        %v2563 = vld [vmem:[%s5 + $0x118] sm:$0xff]
        %v2565 = vsel %vm700, %v2544, 0
        %v2568 = vsel %vm700, %v2545, 0
        %v2571 = vsel %vm700, %v2546, 0
        %v2574 = vsel %vm700, %v2547, 0
        %v2577 = vsel %vm700, %v2548, 0
        %v2580 = vsel %vm700, %v2549, 0
        %v2583 = vsel %vm700, %v2550, 0
        %v2586 = vsel %vm700, %v2551, 0
        %v2589 = vsel %vm700, %v2552, 0
        %v2592 = vsel %vm700, %v2553, 0
        %v2595 = vsel %vm700, %v2554, 0
        %v2598 = vsel %vm700, %v2555, 0
        %v2601 = vsel %vm700, %v2556, 0
        %v2604 = vsel %vm700, %v2557, 0
        %v2607 = vsel %vm700, %v2558, 0
        %v2610 = vsel %vm700, %v2559, 0
        %2612 = vmatprep.subr.mxu0 0.0
        %2613 = vmatpush1.msra.mxu0 0.0
        %2614 = vmatprep.subr.mxu0 0.0
        %2615 = vmatpush1.msra.mxu0 0.0
        %2616 = vmatprep.subr.mxu0 0.0
        %2617 = vmatpush1.msra.mxu0 0.0
        %2618 = vmatprep.subr.mxu0 0.0
        %2619 = vmatpush1.msra.mxu0 0.0
        %2620 = vmatprep.subr.mxu0 0.0
        %2621 = vmatpush1.msra.mxu0 0.0
        %2622 = vmatprep.subr.mxu0 0.0
        %2623 = vmatpush1.msra.mxu0 0.0
        %2624 = vmatprep.subr.mxu0 0.0
        %2625 = vmatpush1.msra.mxu0 0.0
        %2626 = vmatprep.subr.mxu0 0.0
        %2627 = vmatpush1.msra.mxu0 0.0
        %2628 = vmatprep.subr.mxu0 0.0
        %2629 = vmatpush1.msra.mxu0 0.0
        %2630 = vmatprep.subr.mxu0 0.0
        %2631 = vmatpush1.msra.mxu0 0.0
        %2632 = vmatprep.subr.mxu0 0.0
        %2633 = vmatpush1.msra.mxu0 0.0
        %2634 = vmatprep.subr.mxu0 0.0
        %2635 = vmatpush1.msra.mxu0 0.0
        %2636 = vmatprep.subr.mxu0 0.0
        %2637 = vmatpush1.msra.mxu0 %v2563
        %2638 = vmatprep.subr.mxu0 0.0
        %2639 = vmatpush1.msra.mxu0 %v2562
        %2640 = vmatprep.subr.mxu0 0.0
        %2641 = vmatpush1.msra.mxu0 %v2561
        %2642 = vmatprep.subr.mxu0 0.0
        %2643 = vmatpush1.msra.mxu0 %v2560
        %2644 = vmatprep.subr.mxu0 0.0
        %2645 = vmatpush2.msra.mxu0 0.0
        %2646 = vmatprep.subr.mxu0 0.0
        %2647 = vmatpush2.msra.mxu0 0.0
        %2648 = vmatprep.subr.mxu0 0.0
        %2649 = vmatpush2.msra.mxu0 0.0
        %2650 = vmatprep.subr.mxu0 0.0
        %2651 = vmatpush2.msra.mxu0 0.0
        %2652 = vmatprep.subr.mxu0 0.0
        %2653 = vmatpush2.msra.mxu0 0.0
        %2654 = vmatprep.subr.mxu0 0.0
        %2655 = vmatpush2.msra.mxu0 0.0
        %2656 = vmatprep.subr.mxu0 0.0
        %2657 = vmatpush2.msra.mxu0 0.0
        %2658 = vmatprep.subr.mxu0 0.0
        %2659 = vmatpush2.msra.mxu0 0.0
        %2660 = vmatprep.subr.mxu0 0.0
        %2661 = vmatpush2.msra.mxu0 0.0
        %2662 = vmatprep.subr.mxu0 0.0
        %2663 = vmatpush2.msra.mxu0 0.0
        %2664 = vmatprep.subr.mxu0 0.0
        %2665 = vmatpush2.msra.mxu0 0.0
        %2666 = vmatprep.subr.mxu0 0.0
        %2667 = vmatpush2.msra.mxu0 0.0
        %2668 = vmatprep.subr.mxu0 0.0
        %2669 = vmatpush2.msra.mxu0 0.0
        %2670 = vmatprep.subr.mxu0 0.0
        %2671 = vmatpush2.msra.mxu0 0.0
        %2672 = vmatprep.subr.mxu0 0.0
        %2673 = vmatpush2.msra.mxu0 0.0
        %2674 = vmatprep.subr.mxu0 0.0
        %2675 = vmatpush2.msra.mxu0 0.0
        %2676 = vmatprep.mubr.f32.mxu0 0.0
        %2677 = vmatmul.mubr.f32.gmra.mxu0 %v2565
        %v2678 = vpop.f32.mrf.mxu0
        %v2679 = vadd.f32 0.0, %v2678
        %v2680 = vpop.f32.mrf.mxu0
        %2681 = vmatprep.mubr.f32.mxu0 0.0
        %2682 = vmatmul.mubr.f32.gmra.mxu0 %v2568
        %v2683 = vpop.f32.mrf.mxu0
        %v2684 = vadd.f32 0.0, %v2683
        %v2685 = vpop.f32.mrf.mxu0
        %2686 = vmatprep.mubr.f32.mxu0 0.0
        %2687 = vmatmul.mubr.f32.gmra.mxu0 %v2571
        %v2688 = vpop.f32.mrf.mxu0
        %v2689 = vadd.f32 0.0, %v2688
        %v2690 = vpop.f32.mrf.mxu0
        %2691 = vmatprep.mubr.f32.mxu0 0.0
        %2692 = vmatmul.mubr.f32.gmra.mxu0 %v2574
        %v2693 = vpop.f32.mrf.mxu0
        %v2694 = vadd.f32 0.0, %v2693
        %v2695 = vpop.f32.mrf.mxu0
        %2696 = vmatprep.mubr.f32.mxu0 0.0
        %2697 = vmatmul.mubr.f32.gmra.mxu0 %v2577
        %v2698 = vpop.f32.mrf.mxu0
        %v2699 = vadd.f32 0.0, %v2698
        %v2700 = vpop.f32.mrf.mxu0
        %2701 = vmatprep.mubr.f32.mxu0 0.0
        %2702 = vmatmul.mubr.f32.gmra.mxu0 %v2580
        %v2703 = vpop.f32.mrf.mxu0
        %v2704 = vadd.f32 0.0, %v2703
        %v2705 = vpop.f32.mrf.mxu0
        %2706 = vmatprep.mubr.f32.mxu0 0.0
        %2707 = vmatmul.mubr.f32.gmra.mxu0 %v2583
        %v2708 = vpop.f32.mrf.mxu0
        %v2709 = vadd.f32 0.0, %v2708
        %v2710 = vpop.f32.mrf.mxu0
        %2711 = vmatprep.mubr.f32.mxu0 0.0
        %2712 = vmatmul.mubr.f32.gmra.mxu0 %v2586
        %v2713 = vpop.f32.mrf.mxu0
        %v2714 = vadd.f32 0.0, %v2713
        %v2715 = vpop.f32.mrf.mxu0
        %2716 = vmatprep.mubr.f32.mxu0 0.0
        %2717 = vmatmul.mubr.f32.gmra.mxu0 %v2589
        %v2718 = vpop.f32.mrf.mxu0
        %v2719 = vadd.f32 0.0, %v2718
        %v2720 = vpop.f32.mrf.mxu0
        %2721 = vmatprep.mubr.f32.mxu0 0.0
        %2722 = vmatmul.mubr.f32.gmra.mxu0 %v2592
        %v2723 = vpop.f32.mrf.mxu0
        %v2724 = vadd.f32 0.0, %v2723
        %v2725 = vpop.f32.mrf.mxu0
        %2726 = vmatprep.mubr.f32.mxu0 0.0
        %2727 = vmatmul.mubr.f32.gmra.mxu0 %v2595
        %v2728 = vpop.f32.mrf.mxu0
        %v2729 = vadd.f32 0.0, %v2728
        %v2730 = vpop.f32.mrf.mxu0
        %2731 = vmatprep.mubr.f32.mxu0 0.0
        %2732 = vmatmul.mubr.f32.gmra.mxu0 %v2598
        %v2733 = vpop.f32.mrf.mxu0
        %v2734 = vadd.f32 0.0, %v2733
        %v2735 = vpop.f32.mrf.mxu0
        %2736 = vmatprep.mubr.f32.mxu0 0.0
        %2737 = vmatmul.mubr.f32.gmra.mxu0 %v2601
        %v2738 = vpop.f32.mrf.mxu0
        %v2739 = vadd.f32 0.0, %v2738
        %v2740 = vpop.f32.mrf.mxu0
        %2741 = vmatprep.mubr.f32.mxu0 0.0
        %2742 = vmatmul.mubr.f32.gmra.mxu0 %v2604
        %v2743 = vpop.f32.mrf.mxu0
        %v2744 = vadd.f32 0.0, %v2743
        %v2745 = vpop.f32.mrf.mxu0
        %2746 = vmatprep.mubr.f32.mxu0 0.0
        %2747 = vmatmul.mubr.f32.gmra.mxu0 %v2607
        %v2748 = vpop.f32.mrf.mxu0
        %v2749 = vadd.f32 0.0, %v2748
        %v2750 = vpop.f32.mrf.mxu0
        %2751 = vmatprep.mubr.f32.mxu0 0.0
        %2752 = vmatmul.mubr.f32.gmra.mxu0 %v2610
        %v2753 = vpop.f32.mrf.mxu0
        %v2754 = vadd.f32 0.0, %v2753
        %v2755 = vpop.f32.mrf.mxu0
        %2756 = vdwg.mxu0
        %v2757 = vadd.f32 %v2528, %v2679
        %v2758 = vadd.f32 %v2529, %v2684
        %v2759 = vadd.f32 %v2530, %v2689
        %v2760 = vadd.f32 %v2531, %v2694
        %v2761 = vadd.f32 %v2532, %v2699
        %v2762 = vadd.f32 %v2533, %v2704
        %v2763 = vadd.f32 %v2534, %v2709
        %v2764 = vadd.f32 %v2535, %v2714
        %v2765 = vadd.f32 %v2536, %v2719
        %v2766 = vadd.f32 %v2537, %v2724
        %v2767 = vadd.f32 %v2538, %v2729
        %v2768 = vadd.f32 %v2539, %v2734
        %v2769 = vadd.f32 %v2540, %v2739
        %v2770 = vadd.f32 %v2541, %v2744
        %v2771 = vadd.f32 %v2542, %v2749
        %v2772 = vadd.f32 %v2543, %v2754
        %2773 = vxpose.xlu0.b32.start [1/16] %v2757, 128
        %2774 = vxpose.xlu0.b32.cont [2/16] %v2758, 128
        %2775 = vxpose.xlu0.b32.cont [3/16] %v2759, 128
        %2776 = vxpose.xlu0.b32.cont [4/16] %v2760, 128
        %2777 = vxpose.xlu0.b32.cont [5/16] %v2761, 128
        %2778 = vxpose.xlu0.b32.cont [6/16] %v2762, 128
        %2779 = vxpose.xlu0.b32.cont [7/16] %v2763, 128
        %2780 = vxpose.xlu0.b32.cont [8/16] %v2764, 128
        %2781 = vxpose.xlu0.b32.cont [9/16] %v2765, 128
        %2782 = vxpose.xlu0.b32.cont [10/16] %v2766, 128
        %2783 = vxpose.xlu0.b32.cont [11/16] %v2767, 128
        %2784 = vxpose.xlu0.b32.cont [12/16] %v2768, 128
        %2785 = vxpose.xlu0.b32.cont [13/16] %v2769, 128
        %2786 = vxpose.xlu0.b32.cont [14/16] %v2770, 128
        %2787 = vxpose.xlu0.b32.cont [15/16] %v2771, 128
        %2788 = vxpose.xlu0.b32.end [16/16] %v2772, 128
        %v2789 = vpop.trf.xlu0
        %v2790 = vpop.trf.xlu0
        %v2791 = vpop.trf.xlu0
        %v2792 = vpop.trf.xlu0
        %v2793 = vpop.trf.xlu0
        %v2794 = vpop.trf.xlu0
        %v2795 = vpop.trf.xlu0
        %v2796 = vpop.trf.xlu0
        %v2797 = vpop.trf.xlu0
        %v2798 = vpop.trf.xlu0
        %v2799 = vpop.trf.xlu0
        %v2800 = vpop.trf.xlu0
        %v2801 = vpop.trf.xlu0
        %v2802 = vpop.trf.xlu0
        %v2803 = vpop.trf.xlu0
        %v2804 = vpop.trf.xlu0
        %2805 = vst [vmem:[%s258] sm:$0xff] %v2789
        %s2806 = sand.u32 %s173, 1
        %s2807 = scalar_lea.sflag [#allocation4], %s2806
        %s2808 = sand.u32 %s173, 1
        %s2809 = smul.addr %s2808, 8
        %s2810 = scalar_lea.vmem [#allocation3], %s2809
        // Predicated region
        $region45: #{tpu_custom_call.1} parent=43 // pred_check
          %p2811 = pneg %p183
        $region46: #{tpu_custom_call.1} parent=43 // pred_check_branch
          %2813 = sbr.rel (%p2811) target = $region48
        $region47: #{tpu_custom_call.1} parent=43 // pred_region
          %s2815 = ssub.s32 128, 128
          %2816 = vsyncadd %s2807, %s2815
          %s2817 = smul.addr %s24, 2
          %s2818 = sadd.s32 %s25, %s2817
          %s2819 = smul.addr %s2818, 128
          %s2820 = scalar_lea.hbm %s6, %s2819
          %s2822 = sshll.u32 %s2810, 4
          %s2823 = int_to_ptr.vmem [resolvable:$true] %s2822
          %2825 = dma.vmem_to_hbm [thread:$0]  %s2823, 128, %s2820, %s2807
        $region48: #{tpu_custom_call.1} parent=43 // pred_fallthru
          _
      $region44: #{tpu_custom_call.1} parent=5 // pred_fallthru
        _
      %p2826 = scmp.le.s32.totalorder 2, %s15
      // Predicated region
      $region49: #{tpu_custom_call.1} parent=5 // pred_check
        %p2827 = pneg %p2826
      $region50: #{tpu_custom_call.1} parent=5 // pred_check_branch
        %2829 = sbr.rel (%p2827) target = $region52
      $region51: #{tpu_custom_call.1} parent=5 // pred_region
        %s2830 = ssub.s32 %s15, 2
        // Predicated region
        $region53: #{tpu_custom_call.1} parent=51 // pred_check
          %p2831 = pneg %p189
        $region54: #{tpu_custom_call.1} parent=51 // pred_check_branch
          %2833 = sbr.rel (%p2831) target = $region56
        $region55: #{tpu_custom_call.1} parent=51 // pred_region
          %s2834 = sand.u32 %s174, 1
          %s2835 = scalar_lea.sflag [#allocation4], %s2834
          %s2836 = sand.u32 %s174, 1
          %s2837 = smul.addr %s2836, 8
          %s2838 = scalar_lea.vmem [#allocation3], %s2837
          %2839 = dma.done %s2835, 128
        $region56: #{tpu_custom_call.1} parent=51 // pred_fallthru
          _
      $region52: #{tpu_custom_call.1} parent=5 // pred_fallthru
        _
    $region6: #{tpu_custom_call.1} parent=1 // loop_footer
      %s19 = sadd.s32 1, %s15
    $region7: #{tpu_custom_call.1} parent=1 // loop_footer_branch
      %14 = sbr.rel target = $region3
    $region8: #{tpu_custom_call.1} parent=1 // loop_exit
      _
    %2840 = vsyncpa [#allocation4], 1
    %s2841 = scalar_lea.sflag [#allocation4], 1
    %2842 = vsyncpa %s2841, 1

</llo_original>
